<compile_context>
chip_gen: v7x
topology: tpu7x:2x2x1
jax: 0.10.0
libtpu: 0.0.40
codegen_flags: <defaults>
</compile_context>

<pallas_src>
import functools

import jax
import jax.numpy as jnp
import numpy as np
from jax.experimental import pallas as pl
from jax.experimental.pallas import tpu as pltpu

EPS = 1e-5


# ------------------------------ fused Pallas kernel ------------------------------

def _fused_wavenet_kernel(x_ref, w_ref, b_ref, wsc_ref, bsc_ref, out_ref, *,
                          L, C, Cin, layers):
    """One batch element: runs the whole conv stack with x resident in VMEM.

    x_ref  : (1, Cin, L)          input activations
    w_ref  : (nl, C, 3*C)         BN-folded conv weights, taps stacked on cols
    b_ref  : (nl, C, 1)           BN-folded biases
    wsc_ref: (nsc, C, C)          BN-folded 1x1 shortcut weights
    bsc_ref: (nsc, C, 1)          BN-folded 1x1 shortcut biases
    layers : static tuple of (dilation, is_gate, shortcut_index or -1)
    """
    col = jax.lax.broadcasted_iota(jnp.int32, (C, L), 1)      # lane index
    x = x_ref[0].astype(jnp.float32)                          # (Cin, L)
    if Cin < C:                                               # pad channels to Cmax
        x = jnp.concatenate([x, jnp.zeros((C - Cin, L), jnp.float32)], axis=0)

    for li, (d, is_gate, sc) in enumerate(layers):
        # Shifted taps of the zero-padded ("same") conv input, built with XLU
        # lane rotations + masks instead of materialized padding.
        left = jnp.where(col >= d, pltpu.roll(x, d, axis=1), 0.0)          # x[:, t-d]
        right = jnp.where(col < L - d, pltpu.roll(x, L - d, axis=1), 0.0)  # x[:, t+d]
        xs = jnp.concatenate([left, x, right], axis=0)        # (3*C, L)

        # Single MXU matmul for all 3 taps (BN folded into w/b).
        y = jnp.dot(w_ref[li], xs, preferred_element_type=jnp.float32) + b_ref[li]

        e = jnp.exp(-jnp.maximum(y, -30.0))                   # clamp avoids inf*inf
        if not is_gate:                                       # init conv: SiLU
            x = y / (1.0 + e)
        else:
            gate = (1.0 - e) / (1.0 + e * e)                  # == tanh(y)*sigmoid(y)
            if sc < 0:
                res = x                                       # identity residual
            else:                                             # 1x1-conv (+BN) residual
                res = jnp.dot(wsc_ref[sc], x,
                              preferred_element_type=jnp.float32) + bsc_ref[sc]
            x = gate + res

    out_ref[0] = x.astype(out_ref.dtype)


# ------------------------------ packing / pallas_call glue -----------------------

def fold_bn(w, b, bnp, eps=EPS):
    """Fold eval-mode BatchNorm1d into the preceding conv weights/bias."""
    gamma, beta, mean, var = bnp
    s = gamma / jnp.sqrt(var + eps)
    wf = w * s[:, None, None]
    b0 = b if b is not None else jnp.zeros_like(beta)
    bf = s * (b0 - mean) + beta
    return wf, bf


def _pack_conv(wf, bf, cmax):
    """(Cout, Cin, K) folded conv -> (cmax, K*cmax) weight, (cmax, 1) bias."""
    cout, cin, k = wf.shape
    taps = [jnp.pad(wf[:, :, t], ((0, cmax - cout), (0, cmax - cin))) for t in range(k)]
    w = taps[0] if k == 1 else jnp.concatenate(taps, axis=1)
    b = jnp.pad(bf, (0, cmax - cout))[:, None]
    return w, b


def wavenet_convs_pallas(x, params, configs):
    N, cin0, L = x.shape
    cmax = max([params["init"]["w"].shape[0]]
               + [c for (_, c, _, _) in configs]
               + [ci for (ci, _, _, _) in configs])
    cout_final = configs[-1][1]

    # ---- fold BN + pack all layer weights (tiny host/XLA-side ops) ----
    w_list, b_list, meta = [], [], []
    wsc_list, bsc_list = [], []

    wf, bf = fold_bn(params["init"]["w"], params["init"]["b"], params["init"]["bn"])
    w, b = _pack_conv(wf, bf, cmax)
    w_list.append(w); b_list.append(b); meta.append((1, 0, -1))

    for (ci, co, d, sc), lp in zip(configs, params["layers"]):
        wf, bf = fold_bn(lp["w"], None, lp["bn"])
        w, b = _pack_conv(wf, bf, cmax)
        sc_idx = -1
        if sc:
            wsf, bsf = fold_bn(lp["ws"], None, lp["sbn"])
            ws, bs = _pack_conv(wsf, bsf, cmax)
            sc_idx = len(wsc_list)
            wsc_list.append(ws); bsc_list.append(bs)
        w_list.append(w); b_list.append(b); meta.append((d, 1, sc_idx))

    w_stack = jnp.stack(w_list)                       # (nl, cmax, 3*cmax)
    b_stack = jnp.stack(b_list)                       # (nl, cmax, 1)
    if wsc_list:
        wsc_stack = jnp.stack(wsc_list)               # (nsc, cmax, cmax)
        bsc_stack = jnp.stack(bsc_list)               # (nsc, cmax, 1)
    else:
        wsc_stack = jnp.zeros((1, cmax, cmax), jnp.float32)
        bsc_stack = jnp.zeros((1, cmax, 1), jnp.float32)
    nl, nsc = w_stack.shape[0], wsc_stack.shape[0]

    kernel = functools.partial(_fused_wavenet_kernel, L=L, C=cmax, Cin=cin0,
                               layers=tuple(meta))

    out = pl.pallas_call(
        kernel,
        out_shape=jax.ShapeDtypeStruct((N, cmax, L), x.dtype),
        grid=(N,),
        in_specs=[
            pl.BlockSpec((1, cin0, L), lambda n: (n, 0, 0)),
            pl.BlockSpec((nl, cmax, 3 * cmax), lambda n: (0, 0, 0)),
            pl.BlockSpec((nl, cmax, 1), lambda n: (0, 0, 0)),
            pl.BlockSpec((nsc, cmax, cmax), lambda n: (0, 0, 0)),
            pl.BlockSpec((nsc, cmax, 1), lambda n: (0, 0, 0)),
        ],
        out_specs=pl.BlockSpec((1, cmax, L), lambda n: (n, 0, 0)),
        compiler_params=pltpu.CompilerParams(dimension_semantics=("parallel",)),
    )(x, w_stack, b_stack, wsc_stack, bsc_stack)
    return out[:, :cout_final, :]


# ------------------------------ model structure ------------------------------

def layer_configs(feat_sizes=(16, 32), depths=(2, 3)):
    """Returns [(cin, cout, dilation, has_shortcut_mapping), ...] for all WaveNet layers."""
    blocks = [(feat_sizes[0], feat_sizes[0], depths[0])]
    blocks += [(cin, cout, depth)
               for (cin, cout), depth in zip(zip(feat_sizes, feat_sizes[1:]), depths[1:])]
    cfgs = []
    for cin, cout, depth in blocks:
        for i in range(depth):
            lcin = cin if i == 0 else cout
            cfgs.append((lcin, cout, 2 ** i, lcin != cout))
    return cfgs


def init_params(key, in_channels, configs, feat_sizes=(16, 32)):
    keys = iter(jax.random.split(key, 8 * (len(configs) + 1) + 8))

    def conv_w(cout, cin, k):
        return 0.3 * jax.random.normal(next(keys), (cout, cin, k), jnp.float32)

    def bn_p(c):
        gamma = 1.0 + 0.1 * jax.random.normal(next(keys), (c,), jnp.float32)
        beta = 0.1 * jax.random.normal(next(keys), (c,), jnp.float32)
        mean = 0.1 * jax.random.normal(next(keys), (c,), jnp.float32)
        var = 0.5 + jax.random.uniform(next(keys), (c,), jnp.float32)
        return (gamma, beta, mean, var)

    f0 = feat_sizes[0]
    params = {
        "init": {
            "w": conv_w(f0, in_channels, 3),
            "b": 0.1 * jax.random.normal(next(keys), (f0,), jnp.float32),
            "bn": bn_p(f0),
        },
        "layers": [],
    }
    for (cin, cout, d, sc) in configs:
        lp = {"w": conv_w(cout, cin, 3), "bn": bn_p(cout)}   # dilated conv, bias=False
        if sc:
            lp["ws"] = conv_w(cout, cin, 1)                   # shortcut 1x1 conv, bias=False
            lp["sbn"] = bn_p(cout)
        params["layers"].append(lp)
    return params


# ------------------------------ pure-JAX reference ---------------------------

def _ref_conv1d(x, w, d):
    k = w.shape[-1]
    pad = d * (k // 2)
    return jax.lax.conv_general_dilated(
        x, w, window_strides=(1,), padding=[(pad, pad)], rhs_dilation=(d,),
        dimension_numbers=("NCH", "OIH", "NCH"))


def _ref_bn(y, bnp):
    gamma, beta, mean, var = bnp
    return (gamma[None, :, None] * (y - mean[None, :, None])
            / jnp.sqrt(var[None, :, None] + EPS) + beta[None, :, None])


def wavenet_convs_ref(x, params, configs):
    p = params["init"]
    y = _ref_conv1d(x, p["w"], 1) + p["b"][None, :, None]
    y = _ref_bn(y, p["bn"])
    x = y * jax.nn.sigmoid(y)                     # SiLU
    for (cin, cout, d, sc), lp in zip(configs, params["layers"]):
        residual = x
        if sc:
            residual = _ref_bn(_ref_conv1d(x, lp["ws"], 1), lp["sbn"])
        y = _ref_bn(_ref_conv1d(x, lp["w"], d), lp["bn"])
        x = jnp.tanh(y) * jax.nn.sigmoid(y) + residual
    return x


# ------------------------------------ main ------------------------------------

if __name__ == "__main__":
    key = jax.random.PRNGKey(0)
    kx, kp = jax.random.split(key)

    N, C_IN, L = 2, 4, 128                        # x: (batch, in_channels, seq_len)
    x = jax.random.normal(kx, (N, C_IN, L), jnp.float32)

    configs = layer_configs(feat_sizes=(16, 32), depths=(2, 3))
    params = init_params(kp, C_IN, configs, feat_sizes=(16, 32))

    out = jax.block_until_ready(wavenet_convs_pallas(x, params, configs))
    assert out.shape == (N, 32, L), out.shape

    ref = jax.block_until_ready(wavenet_convs_ref(x, params, configs))
    np.testing.assert_allclose(np.asarray(out), np.asarray(ref), rtol=1e-2, atol=1e-2)

    print("KERNEL_OK")
</pallas_src>

<mosaic_0001>
module attributes {stable_mosaic.version = 11 : i64} {
  func.func @_fused_wavenet_kernel(%arg0: i32, %arg1: memref<1x4x128xf32, #tpu.memory_space<vmem>>, %arg2: memref<6x32x96xf32, #tpu.memory_space<vmem>>, %arg3: memref<6x32x1xf32, #tpu.memory_space<vmem>>, %arg4: memref<1x32x32xf32, #tpu.memory_space<vmem>>, %arg5: memref<1x32x1xf32, #tpu.memory_space<vmem>>, %arg6: memref<1x32x128xf32, #tpu.memory_space<vmem>>) attributes {dimension_semantics = [#tpu.dimension_semantics<parallel>], iteration_bounds = array<i64: 2>, scalar_prefetch = 0 : i64, scratch_operands = 0 : i64, tpu.core_type = #tpu.core_type<tc>, window_params = [{transform_indices = @transform_0, window_bounds = array<i64: 1, 4, 128>}, {pipeline_mode = #tpu.pipeline_mode<synchronous>, transform_indices = @transform_1, window_bounds = array<i64: 6, 32, 96>}, {pipeline_mode = #tpu.pipeline_mode<synchronous>, transform_indices = @transform_2, window_bounds = array<i64: 6, 32, 1>}, {pipeline_mode = #tpu.pipeline_mode<synchronous>, transform_indices = @transform_3, window_bounds = array<i64: 1, 32, 32>}, {pipeline_mode = #tpu.pipeline_mode<synchronous>, transform_indices = @transform_4, window_bounds = array<i64: 1, 32, 1>}, {transform_indices = @transform_5, window_bounds = array<i64: 1, 32, 128>}]} {
    %0 = tpu.iota {dimensions = array<i32: 1>} : vector<32x128xi32>
    %c0 = arith.constant 0 : index
    %c0_0 = arith.constant 0 : index
    %c0_1 = arith.constant 0 : index
    %1 = vector.load %arg1[%c0, %c0_0, %c0_1] : memref<1x4x128xf32, #tpu.memory_space<vmem>>, vector<1x4x128xf32>
    %2 = vector.shape_cast %1 : vector<1x4x128xf32> to vector<4x128xf32>
    %cst = arith.constant 0.000000e+00 : f32
    %3 = vector.broadcast %cst : f32 to vector<28x128xf32>
    %4 = tpu.concatenate %2, %3 in 0 : vector<4x128xf32>, vector<28x128xf32> -> vector<32x128xf32>
    %c1_i32 = arith.constant 1 : i32
    %5 = vector.broadcast %c1_i32 : i32 to vector<32x128xi32>
    %6 = arith.cmpi sge, %0, %5 : vector<32x128xi32>
    %c1_i32_2 = arith.constant 1 : i32
    %7 = tpu.dynamic_rotate %4 by %c1_i32_2 dim 1 : vector<32x128xf32>, i32 -> vector<32x128xf32>
    %cst_3 = arith.constant 0.000000e+00 : f32
    %8 = vector.broadcast %cst_3 : f32 to vector<32x128xf32>
    %9 = arith.select %6, %7, %8 : vector<32x128xi1>, vector<32x128xf32>
    %c127_i32 = arith.constant 127 : i32
    %10 = vector.broadcast %c127_i32 : i32 to vector<32x128xi32>
    %11 = arith.cmpi slt, %0, %10 : vector<32x128xi32>
    %c127_i32_4 = arith.constant 127 : i32
    %12 = tpu.dynamic_rotate %4 by %c127_i32_4 dim 1 : vector<32x128xf32>, i32 -> vector<32x128xf32>
    %cst_5 = arith.constant 0.000000e+00 : f32
    %13 = vector.broadcast %cst_5 : f32 to vector<32x128xf32>
    %14 = arith.select %11, %12, %13 : vector<32x128xi1>, vector<32x128xf32>
    %15 = tpu.concatenate %9, %4, %14 in 0 : vector<32x128xf32>, vector<32x128xf32>, vector<32x128xf32> -> vector<96x128xf32>
    %c0_6 = arith.constant 0 : index
    %c0_7 = arith.constant 0 : index
    %c0_8 = arith.constant 0 : index
    %16 = vector.load %arg2[%c0_6, %c0_7, %c0_8] : memref<6x32x96xf32, #tpu.memory_space<vmem>>, vector<1x32x96xf32>
    %17 = vector.shape_cast %16 : vector<1x32x96xf32> to vector<32x96xf32>
    %cst_9 = arith.constant dense<0.000000e+00> : vector<32x128xf32>
    %18 = tpu.matmul %17, %15, %cst_9 {dimension_numbers = #tpu.dot_dimension_numbers<[1], [0], [0], [1], [0, 0, 1, 1], [], []>} : vector<32x96xf32>, vector<96x128xf32>, vector<32x128xf32> -> vector<32x128xf32>
    %c0_10 = arith.constant 0 : index
    %c0_11 = arith.constant 0 : index
    %c0_12 = arith.constant 0 : index
    %19 = vector.load %arg3[%c0_10, %c0_11, %c0_12] : memref<6x32x1xf32, #tpu.memory_space<vmem>>, vector<1x32x1xf32>
    %20 = vector.shape_cast %19 : vector<1x32x1xf32> to vector<32x1xf32>
    %21 = vector.broadcast %20 : vector<32x1xf32> to vector<32x128xf32>
    %22 = arith.addf %18, %21 : vector<32x128xf32>
    %cst_13 = arith.constant -3.000000e+01 : f32
    %23 = vector.broadcast %cst_13 : f32 to vector<32x128xf32>
    %24 = arith.maximumf %22, %23 : vector<32x128xf32>
    %cst_14 = arith.constant 0.000000e+00 : f32
    %25 = vector.broadcast %cst_14 : f32 to vector<32x128xf32>
    %26 = arith.subf %25, %24 : vector<32x128xf32>
    %27 = math.exp %26 : vector<32x128xf32>
    %cst_15 = arith.constant 1.000000e+00 : f32
    %28 = vector.broadcast %cst_15 : f32 to vector<32x128xf32>
    %29 = arith.addf %28, %27 : vector<32x128xf32>
    %30 = arith.divf %22, %29 : vector<32x128xf32>
    %c1_i32_16 = arith.constant 1 : i32
    %31 = vector.broadcast %c1_i32_16 : i32 to vector<32x128xi32>
    %32 = arith.cmpi sge, %0, %31 : vector<32x128xi32>
    %c1_i32_17 = arith.constant 1 : i32
    %33 = tpu.dynamic_rotate %30 by %c1_i32_17 dim 1 : vector<32x128xf32>, i32 -> vector<32x128xf32>
    %cst_18 = arith.constant 0.000000e+00 : f32
    %34 = vector.broadcast %cst_18 : f32 to vector<32x128xf32>
    %35 = arith.select %32, %33, %34 : vector<32x128xi1>, vector<32x128xf32>
    %c127_i32_19 = arith.constant 127 : i32
    %36 = vector.broadcast %c127_i32_19 : i32 to vector<32x128xi32>
    %37 = arith.cmpi slt, %0, %36 : vector<32x128xi32>
    %c127_i32_20 = arith.constant 127 : i32
    %38 = tpu.dynamic_rotate %30 by %c127_i32_20 dim 1 : vector<32x128xf32>, i32 -> vector<32x128xf32>
    %cst_21 = arith.constant 0.000000e+00 : f32
    %39 = vector.broadcast %cst_21 : f32 to vector<32x128xf32>
    %40 = arith.select %37, %38, %39 : vector<32x128xi1>, vector<32x128xf32>
    %41 = tpu.concatenate %35, %30, %40 in 0 : vector<32x128xf32>, vector<32x128xf32>, vector<32x128xf32> -> vector<96x128xf32>
    %c1 = arith.constant 1 : index
    %c0_22 = arith.constant 0 : index
    %c0_23 = arith.constant 0 : index
    %42 = vector.load %arg2[%c1, %c0_22, %c0_23] : memref<6x32x96xf32, #tpu.memory_space<vmem>>, vector<1x32x96xf32>
    %43 = vector.shape_cast %42 : vector<1x32x96xf32> to vector<32x96xf32>
    %cst_24 = arith.constant dense<0.000000e+00> : vector<32x128xf32>
    %44 = tpu.matmul %43, %41, %cst_24 {dimension_numbers = #tpu.dot_dimension_numbers<[1], [0], [0], [1], [0, 0, 1, 1], [], []>} : vector<32x96xf32>, vector<96x128xf32>, vector<32x128xf32> -> vector<32x128xf32>
    %c1_25 = arith.constant 1 : index
    %c0_26 = arith.constant 0 : index
    %c0_27 = arith.constant 0 : index
    %45 = vector.load %arg3[%c1_25, %c0_26, %c0_27] : memref<6x32x1xf32, #tpu.memory_space<vmem>>, vector<1x32x1xf32>
    %46 = vector.shape_cast %45 : vector<1x32x1xf32> to vector<32x1xf32>
    %47 = vector.broadcast %46 : vector<32x1xf32> to vector<32x128xf32>
    %48 = arith.addf %44, %47 : vector<32x128xf32>
    %cst_28 = arith.constant -3.000000e+01 : f32
    %49 = vector.broadcast %cst_28 : f32 to vector<32x128xf32>
    %50 = arith.maximumf %48, %49 : vector<32x128xf32>
    %cst_29 = arith.constant 0.000000e+00 : f32
    %51 = vector.broadcast %cst_29 : f32 to vector<32x128xf32>
    %52 = arith.subf %51, %50 : vector<32x128xf32>
    %53 = math.exp %52 : vector<32x128xf32>
    %cst_30 = arith.constant 1.000000e+00 : f32
    %54 = vector.broadcast %cst_30 : f32 to vector<32x128xf32>
    %55 = arith.subf %54, %53 : vector<32x128xf32>
    %56 = arith.mulf %53, %53 : vector<32x128xf32>
    %cst_31 = arith.constant 1.000000e+00 : f32
    %57 = vector.broadcast %cst_31 : f32 to vector<32x128xf32>
    %58 = arith.addf %57, %56 : vector<32x128xf32>
    %59 = arith.divf %55, %58 : vector<32x128xf32>
    %60 = arith.addf %59, %30 : vector<32x128xf32>
    %c2_i32 = arith.constant 2 : i32
    %61 = vector.broadcast %c2_i32 : i32 to vector<32x128xi32>
    %62 = arith.cmpi sge, %0, %61 : vector<32x128xi32>
    %c2_i32_32 = arith.constant 2 : i32
    %63 = tpu.dynamic_rotate %60 by %c2_i32_32 dim 1 : vector<32x128xf32>, i32 -> vector<32x128xf32>
    %cst_33 = arith.constant 0.000000e+00 : f32
    %64 = vector.broadcast %cst_33 : f32 to vector<32x128xf32>
    %65 = arith.select %62, %63, %64 : vector<32x128xi1>, vector<32x128xf32>
    %c126_i32 = arith.constant 126 : i32
    %66 = vector.broadcast %c126_i32 : i32 to vector<32x128xi32>
    %67 = arith.cmpi slt, %0, %66 : vector<32x128xi32>
    %c126_i32_34 = arith.constant 126 : i32
    %68 = tpu.dynamic_rotate %60 by %c126_i32_34 dim 1 : vector<32x128xf32>, i32 -> vector<32x128xf32>
    %cst_35 = arith.constant 0.000000e+00 : f32
    %69 = vector.broadcast %cst_35 : f32 to vector<32x128xf32>
    %70 = arith.select %67, %68, %69 : vector<32x128xi1>, vector<32x128xf32>
    %71 = tpu.concatenate %65, %60, %70 in 0 : vector<32x128xf32>, vector<32x128xf32>, vector<32x128xf32> -> vector<96x128xf32>
    %c2 = arith.constant 2 : index
    %c0_36 = arith.constant 0 : index
    %c0_37 = arith.constant 0 : index
    %72 = vector.load %arg2[%c2, %c0_36, %c0_37] : memref<6x32x96xf32, #tpu.memory_space<vmem>>, vector<1x32x96xf32>
    %73 = vector.shape_cast %72 : vector<1x32x96xf32> to vector<32x96xf32>
    %cst_38 = arith.constant dense<0.000000e+00> : vector<32x128xf32>
    %74 = tpu.matmul %73, %71, %cst_38 {dimension_numbers = #tpu.dot_dimension_numbers<[1], [0], [0], [1], [0, 0, 1, 1], [], []>} : vector<32x96xf32>, vector<96x128xf32>, vector<32x128xf32> -> vector<32x128xf32>
    %c2_39 = arith.constant 2 : index
    %c0_40 = arith.constant 0 : index
    %c0_41 = arith.constant 0 : index
    %75 = vector.load %arg3[%c2_39, %c0_40, %c0_41] : memref<6x32x1xf32, #tpu.memory_space<vmem>>, vector<1x32x1xf32>
    %76 = vector.shape_cast %75 : vector<1x32x1xf32> to vector<32x1xf32>
    %77 = vector.broadcast %76 : vector<32x1xf32> to vector<32x128xf32>
    %78 = arith.addf %74, %77 : vector<32x128xf32>
    %cst_42 = arith.constant -3.000000e+01 : f32
    %79 = vector.broadcast %cst_42 : f32 to vector<32x128xf32>
    %80 = arith.maximumf %78, %79 : vector<32x128xf32>
    %cst_43 = arith.constant 0.000000e+00 : f32
    %81 = vector.broadcast %cst_43 : f32 to vector<32x128xf32>
    %82 = arith.subf %81, %80 : vector<32x128xf32>
    %83 = math.exp %82 : vector<32x128xf32>
    %cst_44 = arith.constant 1.000000e+00 : f32
    %84 = vector.broadcast %cst_44 : f32 to vector<32x128xf32>
    %85 = arith.subf %84, %83 : vector<32x128xf32>
    %86 = arith.mulf %83, %83 : vector<32x128xf32>
    %cst_45 = arith.constant 1.000000e+00 : f32
    %87 = vector.broadcast %cst_45 : f32 to vector<32x128xf32>
    %88 = arith.addf %87, %86 : vector<32x128xf32>
    %89 = arith.divf %85, %88 : vector<32x128xf32>
    %90 = arith.addf %89, %60 : vector<32x128xf32>
    %c1_i32_46 = arith.constant 1 : i32
    %91 = vector.broadcast %c1_i32_46 : i32 to vector<32x128xi32>
    %92 = arith.cmpi sge, %0, %91 : vector<32x128xi32>
    %c1_i32_47 = arith.constant 1 : i32
    %93 = tpu.dynamic_rotate %90 by %c1_i32_47 dim 1 : vector<32x128xf32>, i32 -> vector<32x128xf32>
    %cst_48 = arith.constant 0.000000e+00 : f32
    %94 = vector.broadcast %cst_48 : f32 to vector<32x128xf32>
    %95 = arith.select %92, %93, %94 : vector<32x128xi1>, vector<32x128xf32>
    %c127_i32_49 = arith.constant 127 : i32
    %96 = vector.broadcast %c127_i32_49 : i32 to vector<32x128xi32>
    %97 = arith.cmpi slt, %0, %96 : vector<32x128xi32>
    %c127_i32_50 = arith.constant 127 : i32
    %98 = tpu.dynamic_rotate %90 by %c127_i32_50 dim 1 : vector<32x128xf32>, i32 -> vector<32x128xf32>
    %cst_51 = arith.constant 0.000000e+00 : f32
    %99 = vector.broadcast %cst_51 : f32 to vector<32x128xf32>
    %100 = arith.select %97, %98, %99 : vector<32x128xi1>, vector<32x128xf32>
    %101 = tpu.concatenate %95, %90, %100 in 0 : vector<32x128xf32>, vector<32x128xf32>, vector<32x128xf32> -> vector<96x128xf32>
    %c3 = arith.constant 3 : index
    %c0_52 = arith.constant 0 : index
    %c0_53 = arith.constant 0 : index
    %102 = vector.load %arg2[%c3, %c0_52, %c0_53] : memref<6x32x96xf32, #tpu.memory_space<vmem>>, vector<1x32x96xf32>
    %103 = vector.shape_cast %102 : vector<1x32x96xf32> to vector<32x96xf32>
    %cst_54 = arith.constant dense<0.000000e+00> : vector<32x128xf32>
    %104 = tpu.matmul %103, %101, %cst_54 {dimension_numbers = #tpu.dot_dimension_numbers<[1], [0], [0], [1], [0, 0, 1, 1], [], []>} : vector<32x96xf32>, vector<96x128xf32>, vector<32x128xf32> -> vector<32x128xf32>
    %c3_55 = arith.constant 3 : index
    %c0_56 = arith.constant 0 : index
    %c0_57 = arith.constant 0 : index
    %105 = vector.load %arg3[%c3_55, %c0_56, %c0_57] : memref<6x32x1xf32, #tpu.memory_space<vmem>>, vector<1x32x1xf32>
    %106 = vector.shape_cast %105 : vector<1x32x1xf32> to vector<32x1xf32>
    %107 = vector.broadcast %106 : vector<32x1xf32> to vector<32x128xf32>
    %108 = arith.addf %104, %107 : vector<32x128xf32>
    %cst_58 = arith.constant -3.000000e+01 : f32
    %109 = vector.broadcast %cst_58 : f32 to vector<32x128xf32>
    %110 = arith.maximumf %108, %109 : vector<32x128xf32>
    %cst_59 = arith.constant 0.000000e+00 : f32
    %111 = vector.broadcast %cst_59 : f32 to vector<32x128xf32>
    %112 = arith.subf %111, %110 : vector<32x128xf32>
    %113 = math.exp %112 : vector<32x128xf32>
    %cst_60 = arith.constant 1.000000e+00 : f32
    %114 = vector.broadcast %cst_60 : f32 to vector<32x128xf32>
    %115 = arith.subf %114, %113 : vector<32x128xf32>
    %116 = arith.mulf %113, %113 : vector<32x128xf32>
    %cst_61 = arith.constant 1.000000e+00 : f32
    %117 = vector.broadcast %cst_61 : f32 to vector<32x128xf32>
    %118 = arith.addf %117, %116 : vector<32x128xf32>
    %119 = arith.divf %115, %118 : vector<32x128xf32>
    %c0_62 = arith.constant 0 : index
    %c0_63 = arith.constant 0 : index
    %c0_64 = arith.constant 0 : index
    %120 = vector.load %arg4[%c0_62, %c0_63, %c0_64] : memref<1x32x32xf32, #tpu.memory_space<vmem>>, vector<1x32x32xf32>
    %121 = vector.shape_cast %120 : vector<1x32x32xf32> to vector<32x32xf32>
    %cst_65 = arith.constant dense<0.000000e+00> : vector<32x128xf32>
    %122 = tpu.matmul %121, %90, %cst_65 {dimension_numbers = #tpu.dot_dimension_numbers<[1], [0], [0], [1], [0, 0, 1, 1], [], []>} : vector<32x32xf32>, vector<32x128xf32>, vector<32x128xf32> -> vector<32x128xf32>
    %c0_66 = arith.constant 0 : index
    %c0_67 = arith.constant 0 : index
    %c0_68 = arith.constant 0 : index
    %123 = vector.load %arg5[%c0_66, %c0_67, %c0_68] : memref<1x32x1xf32, #tpu.memory_space<vmem>>, vector<1x32x1xf32>
    %124 = vector.shape_cast %123 : vector<1x32x1xf32> to vector<32x1xf32>
    %125 = vector.broadcast %124 : vector<32x1xf32> to vector<32x128xf32>
    %126 = arith.addf %122, %125 : vector<32x128xf32>
    %127 = arith.addf %119, %126 : vector<32x128xf32>
    %c2_i32_69 = arith.constant 2 : i32
    %128 = vector.broadcast %c2_i32_69 : i32 to vector<32x128xi32>
    %129 = arith.cmpi sge, %0, %128 : vector<32x128xi32>
    %c2_i32_70 = arith.constant 2 : i32
    %130 = tpu.dynamic_rotate %127 by %c2_i32_70 dim 1 : vector<32x128xf32>, i32 -> vector<32x128xf32>
    %cst_71 = arith.constant 0.000000e+00 : f32
    %131 = vector.broadcast %cst_71 : f32 to vector<32x128xf32>
    %132 = arith.select %129, %130, %131 : vector<32x128xi1>, vector<32x128xf32>
    %c126_i32_72 = arith.constant 126 : i32
    %133 = vector.broadcast %c126_i32_72 : i32 to vector<32x128xi32>
    %134 = arith.cmpi slt, %0, %133 : vector<32x128xi32>
    %c126_i32_73 = arith.constant 126 : i32
    %135 = tpu.dynamic_rotate %127 by %c126_i32_73 dim 1 : vector<32x128xf32>, i32 -> vector<32x128xf32>
    %cst_74 = arith.constant 0.000000e+00 : f32
    %136 = vector.broadcast %cst_74 : f32 to vector<32x128xf32>
    %137 = arith.select %134, %135, %136 : vector<32x128xi1>, vector<32x128xf32>
    %138 = tpu.concatenate %132, %127, %137 in 0 : vector<32x128xf32>, vector<32x128xf32>, vector<32x128xf32> -> vector<96x128xf32>
    %c4 = arith.constant 4 : index
    %c0_75 = arith.constant 0 : index
    %c0_76 = arith.constant 0 : index
    %139 = vector.load %arg2[%c4, %c0_75, %c0_76] : memref<6x32x96xf32, #tpu.memory_space<vmem>>, vector<1x32x96xf32>
    %140 = vector.shape_cast %139 : vector<1x32x96xf32> to vector<32x96xf32>
    %cst_77 = arith.constant dense<0.000000e+00> : vector<32x128xf32>
    %141 = tpu.matmul %140, %138, %cst_77 {dimension_numbers = #tpu.dot_dimension_numbers<[1], [0], [0], [1], [0, 0, 1, 1], [], []>} : vector<32x96xf32>, vector<96x128xf32>, vector<32x128xf32> -> vector<32x128xf32>
    %c4_78 = arith.constant 4 : index
    %c0_79 = arith.constant 0 : index
    %c0_80 = arith.constant 0 : index
    %142 = vector.load %arg3[%c4_78, %c0_79, %c0_80] : memref<6x32x1xf32, #tpu.memory_space<vmem>>, vector<1x32x1xf32>
    %143 = vector.shape_cast %142 : vector<1x32x1xf32> to vector<32x1xf32>
    %144 = vector.broadcast %143 : vector<32x1xf32> to vector<32x128xf32>
    %145 = arith.addf %141, %144 : vector<32x128xf32>
    %cst_81 = arith.constant -3.000000e+01 : f32
    %146 = vector.broadcast %cst_81 : f32 to vector<32x128xf32>
    %147 = arith.maximumf %145, %146 : vector<32x128xf32>
    %cst_82 = arith.constant 0.000000e+00 : f32
    %148 = vector.broadcast %cst_82 : f32 to vector<32x128xf32>
    %149 = arith.subf %148, %147 : vector<32x128xf32>
    %150 = math.exp %149 : vector<32x128xf32>
    %cst_83 = arith.constant 1.000000e+00 : f32
    %151 = vector.broadcast %cst_83 : f32 to vector<32x128xf32>
    %152 = arith.subf %151, %150 : vector<32x128xf32>
    %153 = arith.mulf %150, %150 : vector<32x128xf32>
    %cst_84 = arith.constant 1.000000e+00 : f32
    %154 = vector.broadcast %cst_84 : f32 to vector<32x128xf32>
    %155 = arith.addf %154, %153 : vector<32x128xf32>
    %156 = arith.divf %152, %155 : vector<32x128xf32>
    %157 = arith.addf %156, %127 : vector<32x128xf32>
    %c4_i32 = arith.constant 4 : i32
    %158 = vector.broadcast %c4_i32 : i32 to vector<32x128xi32>
    %159 = arith.cmpi sge, %0, %158 : vector<32x128xi32>
    %c4_i32_85 = arith.constant 4 : i32
    %160 = tpu.dynamic_rotate %157 by %c4_i32_85 dim 1 : vector<32x128xf32>, i32 -> vector<32x128xf32>
    %cst_86 = arith.constant 0.000000e+00 : f32
    %161 = vector.broadcast %cst_86 : f32 to vector<32x128xf32>
    %162 = arith.select %159, %160, %161 : vector<32x128xi1>, vector<32x128xf32>
    %c124_i32 = arith.constant 124 : i32
    %163 = vector.broadcast %c124_i32 : i32 to vector<32x128xi32>
    %164 = arith.cmpi slt, %0, %163 : vector<32x128xi32>
    %c124_i32_87 = arith.constant 124 : i32
    %165 = tpu.dynamic_rotate %157 by %c124_i32_87 dim 1 : vector<32x128xf32>, i32 -> vector<32x128xf32>
    %cst_88 = arith.constant 0.000000e+00 : f32
    %166 = vector.broadcast %cst_88 : f32 to vector<32x128xf32>
    %167 = arith.select %164, %165, %166 : vector<32x128xi1>, vector<32x128xf32>
    %168 = tpu.concatenate %162, %157, %167 in 0 : vector<32x128xf32>, vector<32x128xf32>, vector<32x128xf32> -> vector<96x128xf32>
    %c5 = arith.constant 5 : index
    %c0_89 = arith.constant 0 : index
    %c0_90 = arith.constant 0 : index
    %169 = vector.load %arg2[%c5, %c0_89, %c0_90] : memref<6x32x96xf32, #tpu.memory_space<vmem>>, vector<1x32x96xf32>
    %170 = vector.shape_cast %169 : vector<1x32x96xf32> to vector<32x96xf32>
    %cst_91 = arith.constant dense<0.000000e+00> : vector<32x128xf32>
    %171 = tpu.matmul %170, %168, %cst_91 {dimension_numbers = #tpu.dot_dimension_numbers<[1], [0], [0], [1], [0, 0, 1, 1], [], []>} : vector<32x96xf32>, vector<96x128xf32>, vector<32x128xf32> -> vector<32x128xf32>
    %c5_92 = arith.constant 5 : index
    %c0_93 = arith.constant 0 : index
    %c0_94 = arith.constant 0 : index
    %172 = vector.load %arg3[%c5_92, %c0_93, %c0_94] : memref<6x32x1xf32, #tpu.memory_space<vmem>>, vector<1x32x1xf32>
    %173 = vector.shape_cast %172 : vector<1x32x1xf32> to vector<32x1xf32>
    %174 = vector.broadcast %173 : vector<32x1xf32> to vector<32x128xf32>
    %175 = arith.addf %171, %174 : vector<32x128xf32>
    %cst_95 = arith.constant -3.000000e+01 : f32
    %176 = vector.broadcast %cst_95 : f32 to vector<32x128xf32>
    %177 = arith.maximumf %175, %176 : vector<32x128xf32>
    %cst_96 = arith.constant 0.000000e+00 : f32
    %178 = vector.broadcast %cst_96 : f32 to vector<32x128xf32>
    %179 = arith.subf %178, %177 : vector<32x128xf32>
    %180 = math.exp %179 : vector<32x128xf32>
    %cst_97 = arith.constant 1.000000e+00 : f32
    %181 = vector.broadcast %cst_97 : f32 to vector<32x128xf32>
    %182 = arith.subf %181, %180 : vector<32x128xf32>
    %183 = arith.mulf %180, %180 : vector<32x128xf32>
    %cst_98 = arith.constant 1.000000e+00 : f32
    %184 = vector.broadcast %cst_98 : f32 to vector<32x128xf32>
    %185 = arith.addf %184, %183 : vector<32x128xf32>
    %186 = arith.divf %182, %185 : vector<32x128xf32>
    %187 = arith.addf %186, %157 : vector<32x128xf32>
    %c0_99 = arith.constant 0 : index
    %c0_100 = arith.constant 0 : index
    %c0_101 = arith.constant 0 : index
    %188 = vector.load %arg6[%c0_99, %c0_100, %c0_101] : memref<1x32x128xf32, #tpu.memory_space<vmem>>, vector<1x32x128xf32>
    %189 = vector.shape_cast %188 : vector<1x32x128xf32> to vector<32x128xf32>
    %190 = vector.shape_cast %187 : vector<32x128xf32> to vector<1x32x128xf32>
    tpu.vector_store %arg6[%c0_99, %c0_100, %c0_101], %190 {strides = array<i32>} : memref<1x32x128xf32, #tpu.memory_space<vmem>>, vector<1x32x128xf32>,
    return
  }
  func.func @transform_0(%arg0: i32) -> (i32, i32, i32) {
    %c0_i32 = arith.constant 0 : i32
    %c0_i32_0 = arith.constant 0 : i32
    %c0_i32_1 = arith.constant 0 : i32
    return %arg0, %c0_i32, %c0_i32_0 : i32, i32, i32
  }
  func.func @transform_1(%arg0: i32) -> (i32, i32, i32) {
    %c0_i32 = arith.constant 0 : i32
    %c0_i32_0 = arith.constant 0 : i32
    %c0_i32_1 = arith.constant 0 : i32
    %c0_i32_2 = arith.constant 0 : i32
    return %c0_i32, %c0_i32_0, %c0_i32_1 : i32, i32, i32
  }
  func.func @transform_2(%arg0: i32) -> (i32, i32, i32) {
    %c0_i32 = arith.constant 0 : i32
    %c0_i32_0 = arith.constant 0 : i32
    %c0_i32_1 = arith.constant 0 : i32
    %c0_i32_2 = arith.constant 0 : i32
    return %c0_i32, %c0_i32_0, %c0_i32_1 : i32, i32, i32
  }
  func.func @transform_3(%arg0: i32) -> (i32, i32, i32) {
    %c0_i32 = arith.constant 0 : i32
    %c0_i32_0 = arith.constant 0 : i32
    %c0_i32_1 = arith.constant 0 : i32
    %c0_i32_2 = arith.constant 0 : i32
    return %c0_i32, %c0_i32_0, %c0_i32_1 : i32, i32, i32
  }
  func.func @transform_4(%arg0: i32) -> (i32, i32, i32) {
    %c0_i32 = arith.constant 0 : i32
    %c0_i32_0 = arith.constant 0 : i32
    %c0_i32_1 = arith.constant 0 : i32
    %c0_i32_2 = arith.constant 0 : i32
    return %c0_i32, %c0_i32_0, %c0_i32_1 : i32, i32, i32
  }
  func.func @transform_5(%arg0: i32) -> (i32, i32, i32) {
    %c0_i32 = arith.constant 0 : i32
    %c0_i32_0 = arith.constant 0 : i32
    %c0_i32_1 = arith.constant 0 : i32
    return %arg0, %c0_i32, %c0_i32_0 : i32, i32, i32
  }
}

</mosaic_0001>

<llo_original>
// kernel: tpu_custom_call.1
$region0: #{tpu_custom_call.1}
  #allocation0 [shape = 'u32[]', space=smem, size = 0x4, offset = 0x4, fixed_abs, tag = 'smem constant byte address 0x4 - core index']
  #allocation1 [shape = 'u32[144,128]{1,0:T(1,128)}', space=vmem, size = 0x12000, scoped, tag = 'internal scratch']
  %s0 = inlined_call_operand.vmem [shape: f32[2,4,128], index: 0, kind: input, shape index: {}]
  %s1 = inlined_call_operand.vmem [shape: f32[6,32,96], index: 1, kind: input, shape index: {}]
  %s2 = inlined_call_operand.vmem [shape: f32[6,32,1], index: 2, kind: input, shape index: {}]
  %s3 = inlined_call_operand.vmem [shape: f32[1,32,32], index: 3, kind: input, shape index: {}]
  %s4 = inlined_call_operand.vmem [shape: f32[1,32,1], index: 4, kind: input, shape index: {}]
  %s5 = inlined_call_operand.hbm [shape: f32[2,32,128], index: 5, kind: output, shape index: {}]
  %s6 = sld [smem:[#allocation0]]
  $region53: #{tpu_custom_call.1} parent=0
    _
  %s8 = ssub.s32 1, %s6
  %s9 = scalar_select 0, %s8, %s6
  $region1: #{tpu_custom_call.1} parent=0
    #allocation2 [shape = 'u8[32768]{0}', space=vmem, size = 0x8000, scoped, tag = 'output window, operand 0']
    #allocation3 [shape = 's32[2]{0}', space=sflag, size = 0x8, scoped, tag = 'scoped memory for tpu_custom_call.1']
    %10 = vsyncpa [#allocation3], 0
    %s11 = scalar_lea.sflag [#allocation3], 1
    %12 = vsyncpa %s11, 0
    loop: start=0, step=1, limit=4
    $region2: #{tpu_custom_call.1} parent=1 // loop_pre_header
      _
    $region3: #{tpu_custom_call.1} parent=1 // loop_header
      %s14 = sphi 0, %s18
      %p15 = scmp.ge.s32.totalorder %s14, 4
      %s24 = sphi 0, %s26
      %s27 = sphi 0, %s24
      %s28 = sphi 0, %s27
      %s44 = sphi 0, %s28
      %s48 = sphi 0, %s48
      %s50 = sphi 0, %s48
      %s51 = sphi 0, %s50
      %s65 = sphi 0, %s51
      %s69 = sphi 0, %s69
      %s71 = sphi 0, %s69
      %s72 = sphi 0, %s71
      %s86 = sphi 0, %s72
      %s90 = sphi 0, %s90
      %s92 = sphi 0, %s90
      %s93 = sphi 0, %s92
      %s107 = sphi 0, %s93
      %s111 = sphi 0, %s111
      %s113 = sphi 0, %s111
      %s114 = sphi 0, %s113
      %s128 = sphi 0, %s114
      %s134 = sphi 0, %s136
      %s137 = sphi 0, %s134
      %s138 = sphi 0, %s137
      %s154 = sphi 0, %s138
    $region4: #{tpu_custom_call.1} parent=1 // loop_header_branch
      %17 = sbr.rel (%p15) target = $region8
    $region5: #{tpu_custom_call.1} parent=1 // loop_body
      %s19 = ssub.s32 %s14, 1
      %s20 = ssub.s32 %s14, 2
      %s21 = sadd.s32 %s14, 1
      %s22 = ssub.s32 %s14, %s21
      %p23 = scmp.eq.s32.totalorder %s22, 0
      %s25 = sadd.s32 %s24, 1
      %s26 = scalar_select %p23, %s24, %s25
      %p29 = pneg %p23
      %p30 = scmp.eq.s32.totalorder %s14, 1
      %p31 = por %p29, %p30
      %p32 = scmp.ne.s32.totalorder %s24, %s27
      %p33 = scmp.eq.s32.totalorder %s14, 0
      %p34 = por %p32, %p33
      %p35 = scmp.ne.s32.totalorder %s24, %s27
      %p36 = scmp.eq.s32.totalorder %s19, 1
      %p37 = por %p35, %p36
      %p38 = scmp.ne.s32.totalorder %s27, %s28
      %p39 = scmp.eq.s32.totalorder %s19, 0
      %p40 = por %p38, %p39
      %p41 = scmp.ne.s32.totalorder %s27, %s28
      %p42 = scmp.eq.s32.totalorder %s20, 1
      %p43 = por %p41, %p42
      %p45 = scmp.ne.s32.totalorder %s28, %s44
      %p46 = scmp.eq.s32.totalorder %s20, 0
      %p47 = por %p45, %p46
      %s49 = sadd.s32 %s48, 1
      %p52 = scmp.eq.s32.totalorder %s14, 1
      %p53 = scmp.ne.s32.totalorder %s48, %s50
      %p54 = scmp.eq.s32.totalorder %s14, 0
      %p55 = por %p53, %p54
      %p56 = scmp.ne.s32.totalorder %s48, %s50
      %p57 = scmp.eq.s32.totalorder %s19, 1
      %p58 = por %p56, %p57
      %p59 = scmp.ne.s32.totalorder %s50, %s51
      %p60 = scmp.eq.s32.totalorder %s19, 0
      %p61 = por %p59, %p60
      %p62 = scmp.ne.s32.totalorder %s50, %s51
      %p63 = scmp.eq.s32.totalorder %s20, 1
      %p64 = por %p62, %p63
      %p66 = scmp.ne.s32.totalorder %s51, %s65
      %p67 = scmp.eq.s32.totalorder %s20, 0
      %p68 = por %p66, %p67
      %s70 = sadd.s32 %s69, 1
      %p73 = scmp.eq.s32.totalorder %s14, 1
      %p74 = scmp.ne.s32.totalorder %s69, %s71
      %p75 = scmp.eq.s32.totalorder %s14, 0
      %p76 = por %p74, %p75
      %p77 = scmp.ne.s32.totalorder %s69, %s71
      %p78 = scmp.eq.s32.totalorder %s19, 1
      %p79 = por %p77, %p78
      %p80 = scmp.ne.s32.totalorder %s71, %s72
      %p81 = scmp.eq.s32.totalorder %s19, 0
      %p82 = por %p80, %p81
      %p83 = scmp.ne.s32.totalorder %s71, %s72
      %p84 = scmp.eq.s32.totalorder %s20, 1
      %p85 = por %p83, %p84
      %p87 = scmp.ne.s32.totalorder %s72, %s86
      %p88 = scmp.eq.s32.totalorder %s20, 0
      %p89 = por %p87, %p88
      %s91 = sadd.s32 %s90, 1
      %p94 = scmp.eq.s32.totalorder %s14, 1
      %p95 = scmp.ne.s32.totalorder %s90, %s92
      %p96 = scmp.eq.s32.totalorder %s14, 0
      %p97 = por %p95, %p96
      %p98 = scmp.ne.s32.totalorder %s90, %s92
      %p99 = scmp.eq.s32.totalorder %s19, 1
      %p100 = por %p98, %p99
      %p101 = scmp.ne.s32.totalorder %s92, %s93
      %p102 = scmp.eq.s32.totalorder %s19, 0
      %p103 = por %p101, %p102
      %p104 = scmp.ne.s32.totalorder %s92, %s93
      %p105 = scmp.eq.s32.totalorder %s20, 1
      %p106 = por %p104, %p105
      %p108 = scmp.ne.s32.totalorder %s93, %s107
      %p109 = scmp.eq.s32.totalorder %s20, 0
      %p110 = por %p108, %p109
      %s112 = sadd.s32 %s111, 1
      %p115 = scmp.eq.s32.totalorder %s14, 1
      %p116 = scmp.ne.s32.totalorder %s111, %s113
      %p117 = scmp.eq.s32.totalorder %s14, 0
      %p118 = por %p116, %p117
      %p119 = scmp.ne.s32.totalorder %s111, %s113
      %p120 = scmp.eq.s32.totalorder %s19, 1
      %p121 = por %p119, %p120
      %p122 = scmp.ne.s32.totalorder %s113, %s114
      %p123 = scmp.eq.s32.totalorder %s19, 0
      %p124 = por %p122, %p123
      %p125 = scmp.ne.s32.totalorder %s113, %s114
      %p126 = scmp.eq.s32.totalorder %s20, 1
      %p127 = por %p125, %p126
      %p129 = scmp.ne.s32.totalorder %s114, %s128
      %p130 = scmp.eq.s32.totalorder %s20, 0
      %p131 = por %p129, %p130
      %s132 = ssub.s32 %s14, %s21
      %p133 = scmp.eq.s32.totalorder %s132, 0
      %s135 = sadd.s32 %s134, 1
      %s136 = scalar_select %p133, %s134, %s135
      %p139 = pneg %p133
      %p140 = scmp.eq.s32.totalorder %s14, 1
      %p141 = por %p139, %p140
      %p142 = scmp.ne.s32.totalorder %s134, %s137
      %p143 = scmp.eq.s32.totalorder %s14, 0
      %p144 = por %p142, %p143
      %p145 = scmp.ne.s32.totalorder %s134, %s137
      %p146 = scmp.eq.s32.totalorder %s19, 1
      %p147 = por %p145, %p146
      %p148 = scmp.ne.s32.totalorder %s137, %s138
      %p149 = scmp.eq.s32.totalorder %s19, 0
      %p150 = por %p148, %p149
      %p151 = scmp.ne.s32.totalorder %s137, %s138
      %p152 = scmp.eq.s32.totalorder %s20, 1
      %p153 = por %p151, %p152
      %p155 = scmp.ne.s32.totalorder %s138, %s154
      %p156 = scmp.eq.s32.totalorder %s20, 0
      %p157 = por %p155, %p156
      %p158 = scmp.le.s32.totalorder 1, %s14
      %p159 = scmp.lt.s32.totalorder %s14, 3
      %p160 = pnand %p158, %p159
      %p161 = pneg %p160
      // Predicated region
      $region9: #{tpu_custom_call.1} parent=5 // pred_check
        _
      $region10: #{tpu_custom_call.1} parent=5 // pred_check_branch
        %163 = sbr.rel (%p160) target = $region12
      $region11: #{tpu_custom_call.1} parent=5 // pred_region
        %s164 = ssub.s32 %s14, 1
        // Predicated region
        $region13: #{tpu_custom_call.1} parent=11 // pred_check
          %p165 = pneg %p61
        $region14: #{tpu_custom_call.1} parent=11 // pred_check_branch
          %167 = sbr.rel (%p165) target = $region16
        $region15: #{tpu_custom_call.1} parent=11 // pred_region
          _
        $region16: #{tpu_custom_call.1} parent=11 // pred_fallthru
          _
        // Predicated region
        $region17: #{tpu_custom_call.1} parent=11 // pred_check
          %p168 = pneg %p82
        $region18: #{tpu_custom_call.1} parent=11 // pred_check_branch
          %170 = sbr.rel (%p168) target = $region20
        $region19: #{tpu_custom_call.1} parent=11 // pred_region
          _
        $region20: #{tpu_custom_call.1} parent=11 // pred_fallthru
          _
        // Predicated region
        $region21: #{tpu_custom_call.1} parent=11 // pred_check
          %p171 = pneg %p103
        $region22: #{tpu_custom_call.1} parent=11 // pred_check_branch
          %173 = sbr.rel (%p171) target = $region24
        $region23: #{tpu_custom_call.1} parent=11 // pred_region
          _
        $region24: #{tpu_custom_call.1} parent=11 // pred_fallthru
          _
        // Predicated region
        $region25: #{tpu_custom_call.1} parent=11 // pred_check
          %p174 = pneg %p124
        $region26: #{tpu_custom_call.1} parent=11 // pred_check_branch
          %176 = sbr.rel (%p174) target = $region28
        $region27: #{tpu_custom_call.1} parent=11 // pred_region
          _
        $region28: #{tpu_custom_call.1} parent=11 // pred_fallthru
          _
      $region12: #{tpu_custom_call.1} parent=5 // pred_fallthru
        _
      %p177 = scmp.lt.s32.totalorder %s14, 2
      // Predicated region
      $region29: #{tpu_custom_call.1} parent=5 // pred_check
        %p178 = pneg %p177
      $region30: #{tpu_custom_call.1} parent=5 // pred_check_branch
        %180 = sbr.rel (%p178) target = $region32
      $region31: #{tpu_custom_call.1} parent=5 // pred_region
        // Predicated region
        $region33: #{tpu_custom_call.1} parent=31 // pred_check
          %p181 = pneg %p34
        $region34: #{tpu_custom_call.1} parent=31 // pred_check_branch
          %183 = sbr.rel (%p181) target = $region36
        $region35: #{tpu_custom_call.1} parent=31 // pred_region
          %p184 = scmp.lt.s32.totalorder %s14, 1
          %s185 = scalar_select %p184, %s14, 1
          %s186 = smul.addr %s185, 4
          %s187 = scalar_lea.vmem %s0, %s186
        $region36: #{tpu_custom_call.1} parent=31 // pred_fallthru
          _
      $region32: #{tpu_custom_call.1} parent=5 // pred_fallthru
        _
      %p188 = scmp.le.s32.totalorder 1, %s14
      %p189 = scmp.lt.s32.totalorder %s14, 3
      %p190 = pnand %p188, %p189
      %p191 = pneg %p190
      // Predicated region
      $region37: #{tpu_custom_call.1} parent=5 // pred_check
        _
      $region38: #{tpu_custom_call.1} parent=5 // pred_check_branch
        %193 = sbr.rel (%p190) target = $region40
      $region39: #{tpu_custom_call.1} parent=5 // pred_region
        %s194 = ssub.s32 %s14, 1
        %p195 = scmp.lt.s32.totalorder %s19, 1
        %s196 = scalar_select %p195, %s19, 1
        %s197 = smul.addr %s196, 4
        %s198 = scalar_lea.vmem %s0, %s197
        %p199 = pneg %p40
        %p200 = pneg %p37
        %p201 = pneg %p61
        %p202 = pneg %p58
        %p203 = pneg %p82
        %p204 = pneg %p79
        %p205 = pneg %p103
        %p206 = pneg %p100
        %p207 = pneg %p124
        %p208 = pneg %p121
        %p209 = pneg %p150
        %p210 = pneg %p147
        %s211 = sand.u32 %s137, 1
        %s212 = scalar_lea.sflag [#allocation3], %s211
        %s213 = sand.u32 %s137, 1
        %s214 = smul.addr %s213, 32
        %s215 = scalar_lea.vmem [#allocation2], %s214
        %p216 = scmp.lt.s32.totalorder %s19, 1
        %s217 = scalar_select %p216, %s19, 1
        %s218 = smul.addr %s217, 4
        %s219 = scalar_lea.vmem %s0, %s218
        %v220 = vlaneseq
        %v221 = vand.u32 %v220, 127
        %v222 = vld [vmem:[%s219] sm:$0xf]
        %vm223 = vcmask 1043456
        %v224 = vsel %vm223, %v222, 0.0
        %vm225 = vcmp.ge.s32.totalorder %v221, 1
        %226 = vrot.lane.b32.xlu0 %v224, 1
        %v227 = vpop.permute.xlu0 %226
        %228 = vrot.lane.b32.xlu0 0.0, 1
        %v229 = vpop.permute.xlu0 %228
        %v230 = vsel %vm225, %v227, 0.0
        %v231 = vsel %vm225, %v229, 0.0
        %vm232 = vcmp.lt.s32.totalorder %v221, 127
        %233 = vrot.lane.b32.xlu0 %v224, 127
        %v234 = vpop.permute.xlu0 %233
        %235 = vrot.lane.b32.xlu0 0.0, 127
        %v236 = vpop.permute.xlu0 %235
        %v237 = vsel %vm232, %v234, 0.0
        %v238 = vsel %vm232, %v236, 0.0
        %v239 = vld [vmem:[%s1] sm:$0xff]
        %v240 = vld [vmem:[%s1 + $0x8] sm:$0xff]
        %v241 = vld [vmem:[%s1 + $0x10] sm:$0xff]
        %v242 = vld [vmem:[%s1 + $0x18] sm:$0xff]
        %v243 = vld [vmem:[%s2] sm:$0xff]
        %v244 = vld [vmem:[%s2 + $0x8] sm:$0xff]
        %v245 = vld [vmem:[%s2 + $0x10] sm:$0xff]
        %v246 = vld [vmem:[%s2 + $0x18] sm:$0xff]
        %248 = vset.pattern.permute.xlu0 0
        %249 = vperm.xlu0 %248, %v243
        %v250 = vpop.permute.xlu0 %249
        %253 = vset.pattern.permute.xlu0 0
        %254 = vperm.xlu0 %253, %v244
        %v255 = vpop.permute.xlu0 %254
        %258 = vset.pattern.permute.xlu0 0
        %259 = vperm.xlu0 %258, %v245
        %v260 = vpop.permute.xlu0 %259
        %263 = vset.pattern.permute.xlu0 0
        %264 = vperm.xlu0 %263, %v246
        %v265 = vpop.permute.xlu0 %264
        %vm267 = vcmask 785408
        %v269 = vsel %vm267, %v239, 0
        %v272 = vsel %vm267, %v240, 0
        %v275 = vsel %vm267, %v241, 0
        %v278 = vsel %vm267, %v242, 0
        %280 = vmatprep.subr.mxu0 0.0
        %281 = vmatpush1.msra.mxu0 %v230
        %282 = vmatprep.subr.mxu0 0.0
        %283 = vmatpush1.msra.mxu0 %v231
        %284 = vmatprep.subr.mxu0 0.0
        %285 = vmatpush1.msra.mxu0 %v231
        %286 = vmatprep.subr.mxu0 0.0
        %287 = vmatpush1.msra.mxu0 %v231
        %288 = vmatprep.subr.mxu0 0.0
        %289 = vmatpush1.msra.mxu0 %v224
        %290 = vmatprep.subr.mxu0 0.0
        %291 = vmatpush1.msra.mxu0 0.0
        %292 = vmatprep.subr.mxu0 0.0
        %293 = vmatpush1.msra.mxu0 0.0
        %294 = vmatprep.subr.mxu0 0.0
        %295 = vmatpush1.msra.mxu0 0.0
        %296 = vmatprep.subr.mxu0 0.0
        %297 = vmatpush1.msra.mxu0 %v237
        %298 = vmatprep.subr.mxu0 0.0
        %299 = vmatpush1.msra.mxu0 %v238
        %300 = vmatprep.subr.mxu0 0.0
        %301 = vmatpush1.msra.mxu0 %v238
        %302 = vmatprep.subr.mxu0 0.0
        %303 = vmatpush1.msra.mxu0 %v238
        %304 = vmatprep.subr.mxu0 0.0
        %305 = vmatpush1.msra.mxu0 0.0
        %306 = vmatprep.subr.mxu0 0.0
        %307 = vmatpush1.msra.mxu0 0.0
        %308 = vmatprep.subr.mxu0 0.0
        %309 = vmatpush1.msra.mxu0 0.0
        %310 = vmatprep.subr.mxu0 0.0
        %311 = vmatpush1.msra.mxu0 0.0
        %312 = vmatprep.subr.mxu0 0.0
        %313 = vmatpush1.msra.mxu0 0.0
        %314 = vmatprep.subr.mxu0 0.0
        %315 = vmatpush1.msra.mxu0 0.0
        %316 = vmatprep.subr.mxu0 0.0
        %317 = vmatpush1.msra.mxu0 0.0
        %318 = vmatprep.subr.mxu0 0.0
        %319 = vmatpush1.msra.mxu0 0.0
        %320 = vmatprep.subr.mxu0 0.0
        %321 = vmatpush1.msra.mxu0 0.0
        %322 = vmatprep.subr.mxu0 0.0
        %323 = vmatpush1.msra.mxu0 0.0
        %324 = vmatprep.subr.mxu0 0.0
        %325 = vmatpush1.msra.mxu0 0.0
        %326 = vmatprep.subr.mxu0 0.0
        %327 = vmatpush1.msra.mxu0 0.0
        %328 = vmatprep.subr.mxu0 0.0
        %329 = vmatpush1.msra.mxu0 0.0
        %330 = vmatprep.subr.mxu0 0.0
        %331 = vmatpush1.msra.mxu0 0.0
        %332 = vmatprep.subr.mxu0 0.0
        %333 = vmatpush1.msra.mxu0 0.0
        %334 = vmatprep.subr.mxu0 0.0
        %335 = vmatpush1.msra.mxu0 0.0
        %336 = vmatprep.subr.mxu0 0.0
        %337 = vmatpush1.msra.mxu0 0.0
        %338 = vmatprep.subr.mxu0 0.0
        %339 = vmatpush1.msra.mxu0 0.0
        %340 = vmatprep.subr.mxu0 0.0
        %341 = vmatpush1.msra.mxu0 0.0
        %342 = vmatprep.subr.mxu0 0.0
        %343 = vmatpush1.msra.mxu0 0.0
        %344 = vmatprep.mubr.f32.mxu0 0.0
        %345 = vmatmul.mubr.f32.gmra.mrb[0].mxu0 %v269
        %v346 = vpop.f32.mrb[0].mxu0
        %v347 = vadd.f32 %v250, %v346
        %v348 = vpop.f32.mrb[0].mxu0
        %349 = vmatprep.mubr.f32.mxu0 0.0
        %350 = vmatmul.mubr.f32.gmra.mrb[0].mxu0 %v272
        %v351 = vpop.f32.mrb[0].mxu0
        %v352 = vadd.f32 %v255, %v351
        %v353 = vpop.f32.mrb[0].mxu0
        %354 = vmatprep.mubr.f32.mxu0 0.0
        %355 = vmatmul.mubr.f32.gmra.mrb[0].mxu0 %v275
        %v356 = vpop.f32.mrb[0].mxu0
        %v357 = vadd.f32 %v260, %v356
        %v358 = vpop.f32.mrb[0].mxu0
        %359 = vmatprep.mubr.f32.mxu0 0.0
        %360 = vmatmul.mubr.f32.gmra.mrb[0].mxu0 %v278
        %v361 = vpop.f32.mrb[0].mxu0
        %v362 = vadd.f32 %v265, %v361
        %v363 = vpop.f32.mrb[0].mxu0
        %364 = vdwg.mxu0
        %v365 = vmax.f32 %v347, -30.0
        %v366 = vmax.f32 %v352, -30.0
        %v367 = vmax.f32 %v357, -30.0
        %v368 = vmax.f32 %v362, -30.0
        %v369 = vsub.f32 0.0, %v365
        %v370 = vsub.f32 0.0, %v366
        %v371 = vsub.f32 0.0, %v367
        %v372 = vsub.f32 0.0, %v368
        %v373 = vmul.f32 %v369, 1.442695
        %v374 = vpow.pop %v373
        %v375 = vmul.f32 %v370, 1.442695
        %v376 = vpow.pop %v375
        %v377 = vmul.f32 %v371, 1.442695
        %v378 = vpow.pop %v377
        %v379 = vmul.f32 %v372, 1.442695
        %v380 = vpow.pop %v379
        %v381 = vadd.f32 %v374, 1.0
        %v382 = vadd.f32 %v376, 1.0
        %v383 = vadd.f32 %v378, 1.0
        %v384 = vadd.f32 %v380, 1.0
        %v385 = vrcp.pop %v381
        %v386 = vmul.f32 %v347, %v385
        %v387 = vrcp.pop %v382
        %v388 = vmul.f32 %v352, %v387
        %v389 = vrcp.pop %v383
        %v390 = vmul.f32 %v357, %v389
        %v391 = vrcp.pop %v384
        %v392 = vmul.f32 %v362, %v391
        %393 = vrot.lane.b32.xlu0 %v386, 1
        %v394 = vpop.permute.xlu0 %393
        %395 = vrot.lane.b32.xlu0 %v388, 1
        %v396 = vpop.permute.xlu0 %395
        %397 = vrot.lane.b32.xlu0 %v390, 1
        %v398 = vpop.permute.xlu0 %397
        %399 = vrot.lane.b32.xlu0 %v392, 1
        %v400 = vpop.permute.xlu0 %399
        %v401 = vsel %vm225, %v394, 0.0
        %v402 = vsel %vm225, %v396, 0.0
        %v403 = vsel %vm225, %v398, 0.0
        %v404 = vsel %vm225, %v400, 0.0
        %405 = vrot.lane.b32.xlu0 %v386, 127
        %v406 = vpop.permute.xlu0 %405
        %407 = vrot.lane.b32.xlu0 %v388, 127
        %v408 = vpop.permute.xlu0 %407
        %409 = vrot.lane.b32.xlu0 %v390, 127
        %v410 = vpop.permute.xlu0 %409
        %411 = vrot.lane.b32.xlu0 %v392, 127
        %v412 = vpop.permute.xlu0 %411
        %v413 = vsel %vm232, %v406, 0.0
        %v414 = vsel %vm232, %v408, 0.0
        %v415 = vsel %vm232, %v410, 0.0
        %v416 = vsel %vm232, %v412, 0.0
        %s417 = scalar_lea.vmem %s1, 32
        %v418 = vld [vmem:[%s417] sm:$0xff]
        %v419 = vld [vmem:[%s417 + $0x8] sm:$0xff]
        %v420 = vld [vmem:[%s417 + $0x10] sm:$0xff]
        %v421 = vld [vmem:[%s417 + $0x18] sm:$0xff]
        %s422 = scalar_lea.vmem %s2, 32
        %v423 = vld [vmem:[%s422] sm:$0xff]
        %v424 = vld [vmem:[%s422 + $0x8] sm:$0xff]
        %v425 = vld [vmem:[%s422 + $0x10] sm:$0xff]
        %v426 = vld [vmem:[%s422 + $0x18] sm:$0xff]
        %428 = vset.pattern.permute.xlu0 0
        %429 = vperm.xlu0 %428, %v423
        %v430 = vpop.permute.xlu0 %429
        %433 = vset.pattern.permute.xlu0 0
        %434 = vperm.xlu0 %433, %v424
        %v435 = vpop.permute.xlu0 %434
        %438 = vset.pattern.permute.xlu0 0
        %439 = vperm.xlu0 %438, %v425
        %v440 = vpop.permute.xlu0 %439
        %443 = vset.pattern.permute.xlu0 0
        %444 = vperm.xlu0 %443, %v426
        %v445 = vpop.permute.xlu0 %444
        %v448 = vsel %vm267, %v418, 0
        %v451 = vsel %vm267, %v419, 0
        %v454 = vsel %vm267, %v420, 0
        %v457 = vsel %vm267, %v421, 0
        %459 = vmatprep.subr.mxu0 0.0
        %460 = vmatpush1.msra.mxu0 %v401
        %461 = vmatprep.subr.mxu0 0.0
        %462 = vmatpush1.msra.mxu0 %v402
        %463 = vmatprep.subr.mxu0 0.0
        %464 = vmatpush1.msra.mxu0 %v403
        %465 = vmatprep.subr.mxu0 0.0
        %466 = vmatpush1.msra.mxu0 %v404
        %467 = vmatprep.subr.mxu0 0.0
        %468 = vmatpush1.msra.mxu0 %v386
        %469 = vmatprep.subr.mxu0 0.0
        %470 = vmatpush1.msra.mxu0 %v388
        %471 = vmatprep.subr.mxu0 0.0
        %472 = vmatpush1.msra.mxu0 %v390
        %473 = vmatprep.subr.mxu0 0.0
        %474 = vmatpush1.msra.mxu0 %v392
        %475 = vmatprep.subr.mxu0 0.0
        %476 = vmatpush1.msra.mxu0 %v413
        %477 = vmatprep.subr.mxu0 0.0
        %478 = vmatpush1.msra.mxu0 %v414
        %479 = vmatprep.subr.mxu0 0.0
        %480 = vmatpush1.msra.mxu0 %v415
        %481 = vmatprep.subr.mxu0 0.0
        %482 = vmatpush1.msra.mxu0 %v416
        %483 = vmatprep.subr.mxu0 0.0
        %484 = vmatpush1.msra.mxu0 0.0
        %485 = vmatprep.subr.mxu0 0.0
        %486 = vmatpush1.msra.mxu0 0.0
        %487 = vmatprep.subr.mxu0 0.0
        %488 = vmatpush1.msra.mxu0 0.0
        %489 = vmatprep.subr.mxu0 0.0
        %490 = vmatpush1.msra.mxu0 0.0
        %491 = vmatprep.subr.mxu0 0.0
        %492 = vmatpush1.msra.mxu0 0.0
        %493 = vmatprep.subr.mxu0 0.0
        %494 = vmatpush1.msra.mxu0 0.0
        %495 = vmatprep.subr.mxu0 0.0
        %496 = vmatpush1.msra.mxu0 0.0
        %497 = vmatprep.subr.mxu0 0.0
        %498 = vmatpush1.msra.mxu0 0.0
        %499 = vmatprep.subr.mxu0 0.0
        %500 = vmatpush1.msra.mxu0 0.0
        %501 = vmatprep.subr.mxu0 0.0
        %502 = vmatpush1.msra.mxu0 0.0
        %503 = vmatprep.subr.mxu0 0.0
        %504 = vmatpush1.msra.mxu0 0.0
        %505 = vmatprep.subr.mxu0 0.0
        %506 = vmatpush1.msra.mxu0 0.0
        %507 = vmatprep.subr.mxu0 0.0
        %508 = vmatpush1.msra.mxu0 0.0
        %509 = vmatprep.subr.mxu0 0.0
        %510 = vmatpush1.msra.mxu0 0.0
        %511 = vmatprep.subr.mxu0 0.0
        %512 = vmatpush1.msra.mxu0 0.0
        %513 = vmatprep.subr.mxu0 0.0
        %514 = vmatpush1.msra.mxu0 0.0
        %515 = vmatprep.subr.mxu0 0.0
        %516 = vmatpush1.msra.mxu0 0.0
        %517 = vmatprep.subr.mxu0 0.0
        %518 = vmatpush1.msra.mxu0 0.0
        %519 = vmatprep.subr.mxu0 0.0
        %520 = vmatpush1.msra.mxu0 0.0
        %521 = vmatprep.subr.mxu0 0.0
        %522 = vmatpush1.msra.mxu0 0.0
        %523 = vmatprep.mubr.f32.mxu0 0.0
        %524 = vmatmul.mubr.f32.gmra.mrb[0].mxu0 %v448
        %v525 = vpop.f32.mrb[0].mxu0
        %v526 = vadd.f32 %v430, %v525
        %v527 = vpop.f32.mrb[0].mxu0
        %528 = vmatprep.mubr.f32.mxu0 0.0
        %529 = vmatmul.mubr.f32.gmra.mrb[0].mxu0 %v451
        %v530 = vpop.f32.mrb[0].mxu0
        %v531 = vadd.f32 %v435, %v530
        %v532 = vpop.f32.mrb[0].mxu0
        %533 = vmatprep.mubr.f32.mxu0 0.0
        %534 = vmatmul.mubr.f32.gmra.mrb[0].mxu0 %v454
        %v535 = vpop.f32.mrb[0].mxu0
        %v536 = vadd.f32 %v440, %v535
        %v537 = vpop.f32.mrb[0].mxu0
        %538 = vmatprep.mubr.f32.mxu0 0.0
        %539 = vmatmul.mubr.f32.gmra.mrb[0].mxu0 %v457
        %v540 = vpop.f32.mrb[0].mxu0
        %v541 = vadd.f32 %v445, %v540
        %v542 = vpop.f32.mrb[0].mxu0
        %543 = vdwg.mxu0
        %v544 = vmax.f32 %v526, -30.0
        %v545 = vmax.f32 %v531, -30.0
        %v546 = vmax.f32 %v536, -30.0
        %v547 = vmax.f32 %v541, -30.0
        %v548 = vsub.f32 0.0, %v544
        %v549 = vsub.f32 0.0, %v545
        %v550 = vsub.f32 0.0, %v546
        %v551 = vsub.f32 0.0, %v547
        %v552 = vmul.f32 %v548, 1.442695
        %v553 = vpow.pop %v552
        %v554 = vmul.f32 %v549, 1.442695
        %v555 = vpow.pop %v554
        %v556 = vmul.f32 %v550, 1.442695
        %v557 = vpow.pop %v556
        %v558 = vmul.f32 %v551, 1.442695
        %v559 = vpow.pop %v558
        %v560 = vsub.f32 1.0, %v553
        %v561 = vsub.f32 1.0, %v555
        %v562 = vsub.f32 1.0, %v557
        %v563 = vsub.f32 1.0, %v559
        %v564 = vmul.f32 %v553, %v553
        %v565 = vmul.f32 %v555, %v555
        %v566 = vmul.f32 %v557, %v557
        %v567 = vmul.f32 %v559, %v559
        %v568 = vadd.f32 %v564, 1.0
        %v569 = vadd.f32 %v565, 1.0
        %v570 = vadd.f32 %v566, 1.0
        %v571 = vadd.f32 %v567, 1.0
        %v572 = vrcp.pop %v568
        %v573 = vmul.f32 %v560, %v572
        %v574 = vrcp.pop %v569
        %v575 = vmul.f32 %v561, %v574
        %v576 = vrcp.pop %v570
        %v577 = vmul.f32 %v562, %v576
        %v578 = vrcp.pop %v571
        %v579 = vmul.f32 %v563, %v578
        %v580 = vadd.f32 %v573, %v386
        %v581 = vadd.f32 %v575, %v388
        %v582 = vadd.f32 %v577, %v390
        %v583 = vadd.f32 %v579, %v392
        %vm584 = vcmp.ge.s32.totalorder %v221, 2
        %585 = vrot.lane.b32.xlu0 %v580, 2
        %v586 = vpop.permute.xlu0 %585
        %587 = vrot.lane.b32.xlu0 %v581, 2
        %v588 = vpop.permute.xlu0 %587
        %589 = vrot.lane.b32.xlu0 %v582, 2
        %v590 = vpop.permute.xlu0 %589
        %591 = vrot.lane.b32.xlu0 %v583, 2
        %v592 = vpop.permute.xlu0 %591
        %v593 = vsel %vm584, %v586, 0.0
        %v594 = vsel %vm584, %v588, 0.0
        %v595 = vsel %vm584, %v590, 0.0
        %v596 = vsel %vm584, %v592, 0.0
        %vm597 = vcmp.lt.s32.totalorder %v221, 126
        %598 = vrot.lane.b32.xlu0 %v580, 126
        %v599 = vpop.permute.xlu0 %598
        %600 = vrot.lane.b32.xlu0 %v581, 126
        %v601 = vpop.permute.xlu0 %600
        %602 = vrot.lane.b32.xlu0 %v582, 126
        %v603 = vpop.permute.xlu0 %602
        %604 = vrot.lane.b32.xlu0 %v583, 126
        %v605 = vpop.permute.xlu0 %604
        %v606 = vsel %vm597, %v599, 0.0
        %v607 = vsel %vm597, %v601, 0.0
        %v608 = vsel %vm597, %v603, 0.0
        %v609 = vsel %vm597, %v605, 0.0
        %s610 = scalar_lea.vmem %s1, 64
        %v611 = vld [vmem:[%s610] sm:$0xff]
        %v612 = vld [vmem:[%s610 + $0x8] sm:$0xff]
        %v613 = vld [vmem:[%s610 + $0x10] sm:$0xff]
        %v614 = vld [vmem:[%s610 + $0x18] sm:$0xff]
        %s615 = scalar_lea.vmem %s2, 64
        %v616 = vld [vmem:[%s615] sm:$0xff]
        %v617 = vld [vmem:[%s615 + $0x8] sm:$0xff]
        %v618 = vld [vmem:[%s615 + $0x10] sm:$0xff]
        %v619 = vld [vmem:[%s615 + $0x18] sm:$0xff]
        %621 = vset.pattern.permute.xlu0 0
        %622 = vperm.xlu0 %621, %v616
        %v623 = vpop.permute.xlu0 %622
        %626 = vset.pattern.permute.xlu0 0
        %627 = vperm.xlu0 %626, %v617
        %v628 = vpop.permute.xlu0 %627
        %631 = vset.pattern.permute.xlu0 0
        %632 = vperm.xlu0 %631, %v618
        %v633 = vpop.permute.xlu0 %632
        %636 = vset.pattern.permute.xlu0 0
        %637 = vperm.xlu0 %636, %v619
        %v638 = vpop.permute.xlu0 %637
        %v641 = vsel %vm267, %v611, 0
        %v644 = vsel %vm267, %v612, 0
        %v647 = vsel %vm267, %v613, 0
        %v650 = vsel %vm267, %v614, 0
        %652 = vmatprep.subr.mxu0 0.0
        %653 = vmatpush1.msra.mxu0 %v593
        %654 = vmatprep.subr.mxu0 0.0
        %655 = vmatpush1.msra.mxu0 %v594
        %656 = vmatprep.subr.mxu0 0.0
        %657 = vmatpush1.msra.mxu0 %v595
        %658 = vmatprep.subr.mxu0 0.0
        %659 = vmatpush1.msra.mxu0 %v596
        %660 = vmatprep.subr.mxu0 0.0
        %661 = vmatpush1.msra.mxu0 %v580
        %662 = vmatprep.subr.mxu0 0.0
        %663 = vmatpush1.msra.mxu0 %v581
        %664 = vmatprep.subr.mxu0 0.0
        %665 = vmatpush1.msra.mxu0 %v582
        %666 = vmatprep.subr.mxu0 0.0
        %667 = vmatpush1.msra.mxu0 %v583
        %668 = vmatprep.subr.mxu0 0.0
        %669 = vmatpush1.msra.mxu0 %v606
        %670 = vmatprep.subr.mxu0 0.0
        %671 = vmatpush1.msra.mxu0 %v607
        %672 = vmatprep.subr.mxu0 0.0
        %673 = vmatpush1.msra.mxu0 %v608
        %674 = vmatprep.subr.mxu0 0.0
        %675 = vmatpush1.msra.mxu0 %v609
        %676 = vmatprep.subr.mxu0 0.0
        %677 = vmatpush1.msra.mxu0 0.0
        %678 = vmatprep.subr.mxu0 0.0
        %679 = vmatpush1.msra.mxu0 0.0
        %680 = vmatprep.subr.mxu0 0.0
        %681 = vmatpush1.msra.mxu0 0.0
        %682 = vmatprep.subr.mxu0 0.0
        %683 = vmatpush1.msra.mxu0 0.0
        %684 = vmatprep.subr.mxu0 0.0
        %685 = vmatpush1.msra.mxu0 0.0
        %686 = vmatprep.subr.mxu0 0.0
        %687 = vmatpush1.msra.mxu0 0.0
        %688 = vmatprep.subr.mxu0 0.0
        %689 = vmatpush1.msra.mxu0 0.0
        %690 = vmatprep.subr.mxu0 0.0
        %691 = vmatpush1.msra.mxu0 0.0
        %692 = vmatprep.subr.mxu0 0.0
        %693 = vmatpush1.msra.mxu0 0.0
        %694 = vmatprep.subr.mxu0 0.0
        %695 = vmatpush1.msra.mxu0 0.0
        %696 = vmatprep.subr.mxu0 0.0
        %697 = vmatpush1.msra.mxu0 0.0
        %698 = vmatprep.subr.mxu0 0.0
        %699 = vmatpush1.msra.mxu0 0.0
        %700 = vmatprep.subr.mxu0 0.0
        %701 = vmatpush1.msra.mxu0 0.0
        %702 = vmatprep.subr.mxu0 0.0
        %703 = vmatpush1.msra.mxu0 0.0
        %704 = vmatprep.subr.mxu0 0.0
        %705 = vmatpush1.msra.mxu0 0.0
        %706 = vmatprep.subr.mxu0 0.0
        %707 = vmatpush1.msra.mxu0 0.0
        %708 = vmatprep.subr.mxu0 0.0
        %709 = vmatpush1.msra.mxu0 0.0
        %710 = vmatprep.subr.mxu0 0.0
        %711 = vmatpush1.msra.mxu0 0.0
        %712 = vmatprep.subr.mxu0 0.0
        %713 = vmatpush1.msra.mxu0 0.0
        %714 = vmatprep.subr.mxu0 0.0
        %715 = vmatpush1.msra.mxu0 0.0
        %716 = vmatprep.mubr.f32.mxu0 0.0
        %717 = vmatmul.mubr.f32.gmra.mrb[0].mxu0 %v641
        %v718 = vpop.f32.mrb[0].mxu0
        %v719 = vadd.f32 %v623, %v718
        %v720 = vpop.f32.mrb[0].mxu0
        %721 = vmatprep.mubr.f32.mxu0 0.0
        %722 = vmatmul.mubr.f32.gmra.mrb[0].mxu0 %v644
        %v723 = vpop.f32.mrb[0].mxu0
        %v724 = vadd.f32 %v628, %v723
        %v725 = vpop.f32.mrb[0].mxu0
        %726 = vmatprep.mubr.f32.mxu0 0.0
        %727 = vmatmul.mubr.f32.gmra.mrb[0].mxu0 %v647
        %v728 = vpop.f32.mrb[0].mxu0
        %v729 = vadd.f32 %v633, %v728
        %v730 = vpop.f32.mrb[0].mxu0
        %731 = vmatprep.mubr.f32.mxu0 0.0
        %732 = vmatmul.mubr.f32.gmra.mrb[0].mxu0 %v650
        %v733 = vpop.f32.mrb[0].mxu0
        %v734 = vadd.f32 %v638, %v733
        %v735 = vpop.f32.mrb[0].mxu0
        %736 = vdwg.mxu0
        %v737 = vmax.f32 %v719, -30.0
        %v738 = vmax.f32 %v724, -30.0
        %v739 = vmax.f32 %v729, -30.0
        %v740 = vmax.f32 %v734, -30.0
        %v741 = vsub.f32 0.0, %v737
        %v742 = vsub.f32 0.0, %v738
        %v743 = vsub.f32 0.0, %v739
        %v744 = vsub.f32 0.0, %v740
        %v745 = vmul.f32 %v741, 1.442695
        %v746 = vpow.pop %v745
        %v747 = vmul.f32 %v742, 1.442695
        %v748 = vpow.pop %v747
        %v749 = vmul.f32 %v743, 1.442695
        %v750 = vpow.pop %v749
        %v751 = vmul.f32 %v744, 1.442695
        %v752 = vpow.pop %v751
        %v753 = vsub.f32 1.0, %v746
        %v754 = vsub.f32 1.0, %v748
        %v755 = vsub.f32 1.0, %v750
        %v756 = vsub.f32 1.0, %v752
        %v757 = vmul.f32 %v746, %v746
        %v758 = vmul.f32 %v748, %v748
        %v759 = vmul.f32 %v750, %v750
        %v760 = vmul.f32 %v752, %v752
        %v761 = vadd.f32 %v757, 1.0
        %v762 = vadd.f32 %v758, 1.0
        %v763 = vadd.f32 %v759, 1.0
        %v764 = vadd.f32 %v760, 1.0
        %v765 = vrcp.pop %v761
        %v766 = vmul.f32 %v753, %v765
        %v767 = vrcp.pop %v762
        %v768 = vmul.f32 %v754, %v767
        %v769 = vrcp.pop %v763
        %v770 = vmul.f32 %v755, %v769
        %v771 = vrcp.pop %v764
        %v772 = vmul.f32 %v756, %v771
        %v773 = vadd.f32 %v766, %v580
        %v774 = vadd.f32 %v768, %v581
        %v775 = vadd.f32 %v770, %v582
        %v776 = vadd.f32 %v772, %v583
        %777 = vrot.lane.b32.xlu0 %v773, 1
        %v778 = vpop.permute.xlu0 %777
        %779 = vrot.lane.b32.xlu0 %v774, 1
        %v780 = vpop.permute.xlu0 %779
        %781 = vrot.lane.b32.xlu0 %v775, 1
        %v782 = vpop.permute.xlu0 %781
        %783 = vrot.lane.b32.xlu0 %v776, 1
        %v784 = vpop.permute.xlu0 %783
        %v785 = vsel %vm225, %v778, 0.0
        %v786 = vsel %vm225, %v780, 0.0
        %v787 = vsel %vm225, %v782, 0.0
        %v788 = vsel %vm225, %v784, 0.0
        %789 = vrot.lane.b32.xlu0 %v773, 127
        %v790 = vpop.permute.xlu0 %789
        %791 = vrot.lane.b32.xlu0 %v774, 127
        %v792 = vpop.permute.xlu0 %791
        %793 = vrot.lane.b32.xlu0 %v775, 127
        %v794 = vpop.permute.xlu0 %793
        %795 = vrot.lane.b32.xlu0 %v776, 127
        %v796 = vpop.permute.xlu0 %795
        %v797 = vsel %vm232, %v790, 0.0
        %v798 = vsel %vm232, %v792, 0.0
        %v799 = vsel %vm232, %v794, 0.0
        %v800 = vsel %vm232, %v796, 0.0
        %s801 = scalar_lea.vmem %s1, 96
        %v802 = vld [vmem:[%s801] sm:$0xff]
        %v803 = vld [vmem:[%s801 + $0x8] sm:$0xff]
        %v804 = vld [vmem:[%s801 + $0x10] sm:$0xff]
        %v805 = vld [vmem:[%s801 + $0x18] sm:$0xff]
        %s806 = scalar_lea.vmem %s2, 96
        %v807 = vld [vmem:[%s806] sm:$0xff]
        %v808 = vld [vmem:[%s806 + $0x8] sm:$0xff]
        %v809 = vld [vmem:[%s806 + $0x10] sm:$0xff]
        %v810 = vld [vmem:[%s806 + $0x18] sm:$0xff]
        %812 = vset.pattern.permute.xlu0 0
        %813 = vperm.xlu0 %812, %v807
        %v814 = vpop.permute.xlu0 %813
        %817 = vset.pattern.permute.xlu0 0
        %818 = vperm.xlu0 %817, %v808
        %v819 = vpop.permute.xlu0 %818
        %822 = vset.pattern.permute.xlu0 0
        %823 = vperm.xlu0 %822, %v809
        %v824 = vpop.permute.xlu0 %823
        %827 = vset.pattern.permute.xlu0 0
        %828 = vperm.xlu0 %827, %v810
        %v829 = vpop.permute.xlu0 %828
        %v832 = vsel %vm267, %v802, 0
        %v835 = vsel %vm267, %v803, 0
        %v838 = vsel %vm267, %v804, 0
        %v841 = vsel %vm267, %v805, 0
        %843 = vmatprep.subr.mxu0 0.0
        %844 = vmatpush1.msra.mxu0 %v785
        %845 = vmatprep.subr.mxu0 0.0
        %846 = vmatpush1.msra.mxu0 %v786
        %847 = vmatprep.subr.mxu0 0.0
        %848 = vmatpush1.msra.mxu0 %v787
        %849 = vmatprep.subr.mxu0 0.0
        %850 = vmatpush1.msra.mxu0 %v788
        %851 = vmatprep.subr.mxu0 0.0
        %852 = vmatpush1.msra.mxu0 %v773
        %853 = vmatprep.subr.mxu0 0.0
        %854 = vmatpush1.msra.mxu0 %v774
        %855 = vmatprep.subr.mxu0 0.0
        %856 = vmatpush1.msra.mxu0 %v775
        %857 = vmatprep.subr.mxu0 0.0
        %858 = vmatpush1.msra.mxu0 %v776
        %859 = vmatprep.subr.mxu0 0.0
        %860 = vmatpush1.msra.mxu0 %v797
        %861 = vmatprep.subr.mxu0 0.0
        %862 = vmatpush1.msra.mxu0 %v798
        %863 = vmatprep.subr.mxu0 0.0
        %864 = vmatpush1.msra.mxu0 %v799
        %865 = vmatprep.subr.mxu0 0.0
        %866 = vmatpush1.msra.mxu0 %v800
        %867 = vmatprep.subr.mxu0 0.0
        %868 = vmatpush1.msra.mxu0 0.0
        %869 = vmatprep.subr.mxu0 0.0
        %870 = vmatpush1.msra.mxu0 0.0
        %871 = vmatprep.subr.mxu0 0.0
        %872 = vmatpush1.msra.mxu0 0.0
        %873 = vmatprep.subr.mxu0 0.0
        %874 = vmatpush1.msra.mxu0 0.0
        %875 = vmatprep.subr.mxu0 0.0
        %876 = vmatpush1.msra.mxu0 0.0
        %877 = vmatprep.subr.mxu0 0.0
        %878 = vmatpush1.msra.mxu0 0.0
        %879 = vmatprep.subr.mxu0 0.0
        %880 = vmatpush1.msra.mxu0 0.0
        %881 = vmatprep.subr.mxu0 0.0
        %882 = vmatpush1.msra.mxu0 0.0
        %883 = vmatprep.subr.mxu0 0.0
        %884 = vmatpush1.msra.mxu0 0.0
        %885 = vmatprep.subr.mxu0 0.0
        %886 = vmatpush1.msra.mxu0 0.0
        %887 = vmatprep.subr.mxu0 0.0
        %888 = vmatpush1.msra.mxu0 0.0
        %889 = vmatprep.subr.mxu0 0.0
        %890 = vmatpush1.msra.mxu0 0.0
        %891 = vmatprep.subr.mxu0 0.0
        %892 = vmatpush1.msra.mxu0 0.0
        %893 = vmatprep.subr.mxu0 0.0
        %894 = vmatpush1.msra.mxu0 0.0
        %895 = vmatprep.subr.mxu0 0.0
        %896 = vmatpush1.msra.mxu0 0.0
        %897 = vmatprep.subr.mxu0 0.0
        %898 = vmatpush1.msra.mxu0 0.0
        %899 = vmatprep.subr.mxu0 0.0
        %900 = vmatpush1.msra.mxu0 0.0
        %901 = vmatprep.subr.mxu0 0.0
        %902 = vmatpush1.msra.mxu0 0.0
        %903 = vmatprep.subr.mxu0 0.0
        %904 = vmatpush1.msra.mxu0 0.0
        %905 = vmatprep.subr.mxu0 0.0
        %906 = vmatpush1.msra.mxu0 0.0
        %907 = vmatprep.mubr.f32.mxu0 0.0
        %908 = vmatmul.mubr.f32.gmra.mrb[0].mxu0 %v832
        %v909 = vpop.f32.mrb[0].mxu0
        %v910 = vadd.f32 %v814, %v909
        %v911 = vpop.f32.mrb[0].mxu0
        %912 = vmatprep.mubr.f32.mxu0 0.0
        %913 = vmatmul.mubr.f32.gmra.mrb[0].mxu0 %v835
        %v914 = vpop.f32.mrb[0].mxu0
        %v915 = vadd.f32 %v819, %v914
        %v916 = vpop.f32.mrb[0].mxu0
        %917 = vmatprep.mubr.f32.mxu0 0.0
        %918 = vmatmul.mubr.f32.gmra.mrb[0].mxu0 %v838
        %v919 = vpop.f32.mrb[0].mxu0
        %v920 = vadd.f32 %v824, %v919
        %v921 = vpop.f32.mrb[0].mxu0
        %922 = vmatprep.mubr.f32.mxu0 0.0
        %923 = vmatmul.mubr.f32.gmra.mrb[0].mxu0 %v841
        %v924 = vpop.f32.mrb[0].mxu0
        %v925 = vadd.f32 %v829, %v924
        %v926 = vpop.f32.mrb[0].mxu0
        %927 = vdwg.mxu0
        %v928 = vmax.f32 %v910, -30.0
        %v929 = vmax.f32 %v915, -30.0
        %v930 = vmax.f32 %v920, -30.0
        %v931 = vmax.f32 %v925, -30.0
        %v932 = vsub.f32 0.0, %v928
        %v933 = vsub.f32 0.0, %v929
        %v934 = vsub.f32 0.0, %v930
        %v935 = vsub.f32 0.0, %v931
        %v936 = vmul.f32 %v932, 1.442695
        %v937 = vpow.pop %v936
        %v938 = vmul.f32 %v933, 1.442695
        %v939 = vpow.pop %v938
        %v940 = vmul.f32 %v934, 1.442695
        %v941 = vpow.pop %v940
        %v942 = vmul.f32 %v935, 1.442695
        %v943 = vpow.pop %v942
        %v944 = vsub.f32 1.0, %v937
        %v945 = vsub.f32 1.0, %v939
        %v946 = vsub.f32 1.0, %v941
        %v947 = vsub.f32 1.0, %v943
        %v948 = vmul.f32 %v937, %v937
        %v949 = vmul.f32 %v939, %v939
        %v950 = vmul.f32 %v941, %v941
        %v951 = vmul.f32 %v943, %v943
        %v952 = vadd.f32 %v948, 1.0
        %v953 = vadd.f32 %v949, 1.0
        %v954 = vadd.f32 %v950, 1.0
        %v955 = vadd.f32 %v951, 1.0
        %v956 = vrcp.pop %v952
        %v957 = vmul.f32 %v944, %v956
        %v958 = vrcp.pop %v953
        %v959 = vmul.f32 %v945, %v958
        %v960 = vrcp.pop %v954
        %v961 = vmul.f32 %v946, %v960
        %v962 = vrcp.pop %v955
        %v963 = vmul.f32 %v947, %v962
        %v964 = vld [vmem:[%s3] sm:$0xff]
        %v965 = vld [vmem:[%s3 + $0x8] sm:$0xff]
        %v966 = vld [vmem:[%s3 + $0x10] sm:$0xff]
        %v967 = vld [vmem:[%s3 + $0x18] sm:$0xff]
        %v968 = vld [vmem:[%s4] sm:$0xff]
        %v969 = vld [vmem:[%s4 + $0x8] sm:$0xff]
        %v970 = vld [vmem:[%s4 + $0x10] sm:$0xff]
        %v971 = vld [vmem:[%s4 + $0x18] sm:$0xff]
        %973 = vset.pattern.permute.xlu0 0
        %974 = vperm.xlu0 %973, %v968
        %v975 = vpop.permute.xlu0 %974
        %978 = vset.pattern.permute.xlu0 0
        %979 = vperm.xlu0 %978, %v969
        %v980 = vpop.permute.xlu0 %979
        %983 = vset.pattern.permute.xlu0 0
        %984 = vperm.xlu0 %983, %v970
        %v985 = vpop.permute.xlu0 %984
        %988 = vset.pattern.permute.xlu0 0
        %989 = vperm.xlu0 %988, %v971
        %v990 = vpop.permute.xlu0 %989
        %vm992 = vcmask 261120
        %v994 = vsel %vm992, %v964, 0
        %v997 = vsel %vm992, %v965, 0
        %v1000 = vsel %vm992, %v966, 0
        %v1003 = vsel %vm992, %v967, 0
        %1005 = vmatprep.subr.mxu0 0.0
        %1006 = vmatpush1.msra.mxu0 %v773
        %1007 = vmatprep.subr.mxu0 0.0
        %1008 = vmatpush1.msra.mxu0 %v774
        %1009 = vmatprep.subr.mxu0 0.0
        %1010 = vmatpush1.msra.mxu0 %v775
        %1011 = vmatprep.subr.mxu0 0.0
        %1012 = vmatpush1.msra.mxu0 %v776
        %1013 = vmatprep.subr.mxu0 0.0
        %1014 = vmatpush1.msra.mxu0 0.0
        %1015 = vmatprep.subr.mxu0 0.0
        %1016 = vmatpush1.msra.mxu0 0.0
        %1017 = vmatprep.subr.mxu0 0.0
        %1018 = vmatpush1.msra.mxu0 0.0
        %1019 = vmatprep.subr.mxu0 0.0
        %1020 = vmatpush1.msra.mxu0 0.0
        %1021 = vmatprep.subr.mxu0 0.0
        %1022 = vmatpush1.msra.mxu0 0.0
        %1023 = vmatprep.subr.mxu0 0.0
        %1024 = vmatpush1.msra.mxu0 0.0
        %1025 = vmatprep.subr.mxu0 0.0
        %1026 = vmatpush1.msra.mxu0 0.0
        %1027 = vmatprep.subr.mxu0 0.0
        %1028 = vmatpush1.msra.mxu0 0.0
        %1029 = vmatprep.subr.mxu0 0.0
        %1030 = vmatpush1.msra.mxu0 0.0
        %1031 = vmatprep.subr.mxu0 0.0
        %1032 = vmatpush1.msra.mxu0 0.0
        %1033 = vmatprep.subr.mxu0 0.0
        %1034 = vmatpush1.msra.mxu0 0.0
        %1035 = vmatprep.subr.mxu0 0.0
        %1036 = vmatpush1.msra.mxu0 0.0
        %1037 = vmatprep.subr.mxu0 0.0
        %1038 = vmatpush1.msra.mxu0 0.0
        %1039 = vmatprep.subr.mxu0 0.0
        %1040 = vmatpush1.msra.mxu0 0.0
        %1041 = vmatprep.subr.mxu0 0.0
        %1042 = vmatpush1.msra.mxu0 0.0
        %1043 = vmatprep.subr.mxu0 0.0
        %1044 = vmatpush1.msra.mxu0 0.0
        %1045 = vmatprep.subr.mxu0 0.0
        %1046 = vmatpush1.msra.mxu0 0.0
        %1047 = vmatprep.subr.mxu0 0.0
        %1048 = vmatpush1.msra.mxu0 0.0
        %1049 = vmatprep.subr.mxu0 0.0
        %1050 = vmatpush1.msra.mxu0 0.0
        %1051 = vmatprep.subr.mxu0 0.0
        %1052 = vmatpush1.msra.mxu0 0.0
        %1053 = vmatprep.subr.mxu0 0.0
        %1054 = vmatpush1.msra.mxu0 0.0
        %1055 = vmatprep.subr.mxu0 0.0
        %1056 = vmatpush1.msra.mxu0 0.0
        %1057 = vmatprep.subr.mxu0 0.0
        %1058 = vmatpush1.msra.mxu0 0.0
        %1059 = vmatprep.subr.mxu0 0.0
        %1060 = vmatpush1.msra.mxu0 0.0
        %1061 = vmatprep.subr.mxu0 0.0
        %1062 = vmatpush1.msra.mxu0 0.0
        %1063 = vmatprep.subr.mxu0 0.0
        %1064 = vmatpush1.msra.mxu0 0.0
        %1065 = vmatprep.subr.mxu0 0.0
        %1066 = vmatpush1.msra.mxu0 0.0
        %1067 = vmatprep.subr.mxu0 0.0
        %1068 = vmatpush1.msra.mxu0 0.0
        %1069 = vmatprep.mubr.f32.mxu0 0.0
        %1070 = vmatmul.mubr.f32.gmra.mrb[0].mxu0 %v994
        %v1071 = vpop.f32.mrb[0].mxu0
        %v1072 = vadd.f32 %v975, %v1071
        %v1073 = vpop.f32.mrb[0].mxu0
        %1074 = vmatprep.mubr.f32.mxu0 0.0
        %1075 = vmatmul.mubr.f32.gmra.mrb[0].mxu0 %v997
        %v1076 = vpop.f32.mrb[0].mxu0
        %v1077 = vadd.f32 %v980, %v1076
        %v1078 = vpop.f32.mrb[0].mxu0
        %1079 = vmatprep.mubr.f32.mxu0 0.0
        %1080 = vmatmul.mubr.f32.gmra.mrb[0].mxu0 %v1000
        %v1081 = vpop.f32.mrb[0].mxu0
        %v1082 = vadd.f32 %v985, %v1081
        %v1083 = vpop.f32.mrb[0].mxu0
        %1084 = vmatprep.mubr.f32.mxu0 0.0
        %1085 = vmatmul.mubr.f32.gmra.mrb[0].mxu0 %v1003
        %v1086 = vpop.f32.mrb[0].mxu0
        %v1087 = vadd.f32 %v990, %v1086
        %v1088 = vpop.f32.mrb[0].mxu0
        %1089 = vdwg.mxu0
        %v1090 = vadd.f32 %v957, %v1072
        %v1091 = vadd.f32 %v959, %v1077
        %v1092 = vadd.f32 %v961, %v1082
        %v1093 = vadd.f32 %v963, %v1087
        %1094 = vrot.lane.b32.xlu0 %v1090, 2
        %v1095 = vpop.permute.xlu0 %1094
        %1096 = vrot.lane.b32.xlu0 %v1091, 2
        %v1097 = vpop.permute.xlu0 %1096
        %1098 = vrot.lane.b32.xlu0 %v1092, 2
        %v1099 = vpop.permute.xlu0 %1098
        %1100 = vrot.lane.b32.xlu0 %v1093, 2
        %v1101 = vpop.permute.xlu0 %1100
        %v1102 = vsel %vm584, %v1095, 0.0
        %v1103 = vsel %vm584, %v1097, 0.0
        %v1104 = vsel %vm584, %v1099, 0.0
        %v1105 = vsel %vm584, %v1101, 0.0
        %1106 = vrot.lane.b32.xlu0 %v1090, 126
        %v1107 = vpop.permute.xlu0 %1106
        %1108 = vrot.lane.b32.xlu0 %v1091, 126
        %v1109 = vpop.permute.xlu0 %1108
        %1110 = vrot.lane.b32.xlu0 %v1092, 126
        %v1111 = vpop.permute.xlu0 %1110
        %1112 = vrot.lane.b32.xlu0 %v1093, 126
        %v1113 = vpop.permute.xlu0 %1112
        %v1114 = vsel %vm597, %v1107, 0.0
        %v1115 = vsel %vm597, %v1109, 0.0
        %v1116 = vsel %vm597, %v1111, 0.0
        %v1117 = vsel %vm597, %v1113, 0.0
        %s1118 = scalar_lea.vmem %s1, 128
        %v1119 = vld [vmem:[%s1118] sm:$0xff]
        %v1120 = vld [vmem:[%s1118 + $0x8] sm:$0xff]
        %v1121 = vld [vmem:[%s1118 + $0x10] sm:$0xff]
        %v1122 = vld [vmem:[%s1118 + $0x18] sm:$0xff]
        %s1123 = scalar_lea.vmem %s2, 128
        %v1124 = vld [vmem:[%s1123] sm:$0xff]
        %v1125 = vld [vmem:[%s1123 + $0x8] sm:$0xff]
        %v1126 = vld [vmem:[%s1123 + $0x10] sm:$0xff]
        %v1127 = vld [vmem:[%s1123 + $0x18] sm:$0xff]
        %1129 = vset.pattern.permute.xlu0 0
        %1130 = vperm.xlu0 %1129, %v1124
        %v1131 = vpop.permute.xlu0 %1130
        %1134 = vset.pattern.permute.xlu0 0
        %1135 = vperm.xlu0 %1134, %v1125
        %v1136 = vpop.permute.xlu0 %1135
        %1139 = vset.pattern.permute.xlu0 0
        %1140 = vperm.xlu0 %1139, %v1126
        %v1141 = vpop.permute.xlu0 %1140
        %1144 = vset.pattern.permute.xlu0 0
        %1145 = vperm.xlu0 %1144, %v1127
        %v1146 = vpop.permute.xlu0 %1145
        %v1149 = vsel %vm267, %v1119, 0
        %v1152 = vsel %vm267, %v1120, 0
        %v1155 = vsel %vm267, %v1121, 0
        %v1158 = vsel %vm267, %v1122, 0
        %1160 = vmatprep.subr.mxu0 0.0
        %1161 = vmatpush1.msra.mxu0 %v1102
        %1162 = vmatprep.subr.mxu0 0.0
        %1163 = vmatpush1.msra.mxu0 %v1103
        %1164 = vmatprep.subr.mxu0 0.0
        %1165 = vmatpush1.msra.mxu0 %v1104
        %1166 = vmatprep.subr.mxu0 0.0
        %1167 = vmatpush1.msra.mxu0 %v1105
        %1168 = vmatprep.subr.mxu0 0.0
        %1169 = vmatpush1.msra.mxu0 %v1090
        %1170 = vmatprep.subr.mxu0 0.0
        %1171 = vmatpush1.msra.mxu0 %v1091
        %1172 = vmatprep.subr.mxu0 0.0
        %1173 = vmatpush1.msra.mxu0 %v1092
        %1174 = vmatprep.subr.mxu0 0.0
        %1175 = vmatpush1.msra.mxu0 %v1093
        %1176 = vmatprep.subr.mxu0 0.0
        %1177 = vmatpush1.msra.mxu0 %v1114
        %1178 = vmatprep.subr.mxu0 0.0
        %1179 = vmatpush1.msra.mxu0 %v1115
        %1180 = vmatprep.subr.mxu0 0.0
        %1181 = vmatpush1.msra.mxu0 %v1116
        %1182 = vmatprep.subr.mxu0 0.0
        %1183 = vmatpush1.msra.mxu0 %v1117
        %1184 = vmatprep.subr.mxu0 0.0
        %1185 = vmatpush1.msra.mxu0 0.0
        %1186 = vmatprep.subr.mxu0 0.0
        %1187 = vmatpush1.msra.mxu0 0.0
        %1188 = vmatprep.subr.mxu0 0.0
        %1189 = vmatpush1.msra.mxu0 0.0
        %1190 = vmatprep.subr.mxu0 0.0
        %1191 = vmatpush1.msra.mxu0 0.0
        %1192 = vmatprep.subr.mxu0 0.0
        %1193 = vmatpush1.msra.mxu0 0.0
        %1194 = vmatprep.subr.mxu0 0.0
        %1195 = vmatpush1.msra.mxu0 0.0
        %1196 = vmatprep.subr.mxu0 0.0
        %1197 = vmatpush1.msra.mxu0 0.0
        %1198 = vmatprep.subr.mxu0 0.0
        %1199 = vmatpush1.msra.mxu0 0.0
        %1200 = vmatprep.subr.mxu0 0.0
        %1201 = vmatpush1.msra.mxu0 0.0
        %1202 = vmatprep.subr.mxu0 0.0
        %1203 = vmatpush1.msra.mxu0 0.0
        %1204 = vmatprep.subr.mxu0 0.0
        %1205 = vmatpush1.msra.mxu0 0.0
        %1206 = vmatprep.subr.mxu0 0.0
        %1207 = vmatpush1.msra.mxu0 0.0
        %1208 = vmatprep.subr.mxu0 0.0
        %1209 = vmatpush1.msra.mxu0 0.0
        %1210 = vmatprep.subr.mxu0 0.0
        %1211 = vmatpush1.msra.mxu0 0.0
        %1212 = vmatprep.subr.mxu0 0.0
        %1213 = vmatpush1.msra.mxu0 0.0
        %1214 = vmatprep.subr.mxu0 0.0
        %1215 = vmatpush1.msra.mxu0 0.0
        %1216 = vmatprep.subr.mxu0 0.0
        %1217 = vmatpush1.msra.mxu0 0.0
        %1218 = vmatprep.subr.mxu0 0.0
        %1219 = vmatpush1.msra.mxu0 0.0
        %1220 = vmatprep.subr.mxu0 0.0
        %1221 = vmatpush1.msra.mxu0 0.0
        %1222 = vmatprep.subr.mxu0 0.0
        %1223 = vmatpush1.msra.mxu0 0.0
        %1224 = vmatprep.mubr.f32.mxu0 0.0
        %1225 = vmatmul.mubr.f32.gmra.mrb[0].mxu0 %v1149
        %v1226 = vpop.f32.mrb[0].mxu0
        %v1227 = vadd.f32 %v1131, %v1226
        %v1228 = vpop.f32.mrb[0].mxu0
        %1229 = vmatprep.mubr.f32.mxu0 0.0
        %1230 = vmatmul.mubr.f32.gmra.mrb[0].mxu0 %v1152
        %v1231 = vpop.f32.mrb[0].mxu0
        %v1232 = vadd.f32 %v1136, %v1231
        %v1233 = vpop.f32.mrb[0].mxu0
        %1234 = vmatprep.mubr.f32.mxu0 0.0
        %1235 = vmatmul.mubr.f32.gmra.mrb[0].mxu0 %v1155
        %v1236 = vpop.f32.mrb[0].mxu0
        %v1237 = vadd.f32 %v1141, %v1236
        %v1238 = vpop.f32.mrb[0].mxu0
        %1239 = vmatprep.mubr.f32.mxu0 0.0
        %1240 = vmatmul.mubr.f32.gmra.mrb[0].mxu0 %v1158
        %v1241 = vpop.f32.mrb[0].mxu0
        %v1242 = vadd.f32 %v1146, %v1241
        %v1243 = vpop.f32.mrb[0].mxu0
        %1244 = vdwg.mxu0
        %v1245 = vmax.f32 %v1227, -30.0
        %v1246 = vmax.f32 %v1232, -30.0
        %v1247 = vmax.f32 %v1237, -30.0
        %v1248 = vmax.f32 %v1242, -30.0
        %v1249 = vsub.f32 0.0, %v1245
        %v1250 = vsub.f32 0.0, %v1246
        %v1251 = vsub.f32 0.0, %v1247
        %v1252 = vsub.f32 0.0, %v1248
        %v1253 = vmul.f32 %v1249, 1.442695
        %v1254 = vpow.pop %v1253
        %v1255 = vmul.f32 %v1250, 1.442695
        %v1256 = vpow.pop %v1255
        %v1257 = vmul.f32 %v1251, 1.442695
        %v1258 = vpow.pop %v1257
        %v1259 = vmul.f32 %v1252, 1.442695
        %v1260 = vpow.pop %v1259
        %v1261 = vsub.f32 1.0, %v1254
        %v1262 = vsub.f32 1.0, %v1256
        %v1263 = vsub.f32 1.0, %v1258
        %v1264 = vsub.f32 1.0, %v1260
        %v1265 = vmul.f32 %v1254, %v1254
        %v1266 = vmul.f32 %v1256, %v1256
        %v1267 = vmul.f32 %v1258, %v1258
        %v1268 = vmul.f32 %v1260, %v1260
        %v1269 = vadd.f32 %v1265, 1.0
        %v1270 = vadd.f32 %v1266, 1.0
        %v1271 = vadd.f32 %v1267, 1.0
        %v1272 = vadd.f32 %v1268, 1.0
        %v1273 = vrcp.pop %v1269
        %v1274 = vmul.f32 %v1261, %v1273
        %v1275 = vrcp.pop %v1270
        %v1276 = vmul.f32 %v1262, %v1275
        %v1277 = vrcp.pop %v1271
        %v1278 = vmul.f32 %v1263, %v1277
        %v1279 = vrcp.pop %v1272
        %v1280 = vmul.f32 %v1264, %v1279
        %v1281 = vadd.f32 %v1274, %v1090
        %v1282 = vadd.f32 %v1276, %v1091
        %v1283 = vadd.f32 %v1278, %v1092
        %v1284 = vadd.f32 %v1280, %v1093
        %vm1285 = vcmp.ge.s32.totalorder %v221, 4
        %1286 = vrot.lane.b32.xlu0 %v1281, 4
        %v1287 = vpop.permute.xlu0 %1286
        %1288 = vrot.lane.b32.xlu0 %v1282, 4
        %v1289 = vpop.permute.xlu0 %1288
        %1290 = vrot.lane.b32.xlu0 %v1283, 4
        %v1291 = vpop.permute.xlu0 %1290
        %1292 = vrot.lane.b32.xlu0 %v1284, 4
        %v1293 = vpop.permute.xlu0 %1292
        %v1294 = vsel %vm1285, %v1287, 0.0
        %v1295 = vsel %vm1285, %v1289, 0.0
        %v1296 = vsel %vm1285, %v1291, 0.0
        %v1297 = vsel %vm1285, %v1293, 0.0
        %vm1298 = vcmp.lt.s32.totalorder %v221, 124
        %1299 = vrot.lane.b32.xlu0 %v1281, 124
        %v1300 = vpop.permute.xlu0 %1299
        %1301 = vrot.lane.b32.xlu0 %v1282, 124
        %v1302 = vpop.permute.xlu0 %1301
        %1303 = vrot.lane.b32.xlu0 %v1283, 124
        %v1304 = vpop.permute.xlu0 %1303
        %1305 = vrot.lane.b32.xlu0 %v1284, 124
        %v1306 = vpop.permute.xlu0 %1305
        %v1307 = vsel %vm1298, %v1300, 0.0
        %v1308 = vsel %vm1298, %v1302, 0.0
        %v1309 = vsel %vm1298, %v1304, 0.0
        %v1310 = vsel %vm1298, %v1306, 0.0
        %s1311 = scalar_lea.vmem %s1, 160
        %v1312 = vld [vmem:[%s1311] sm:$0xff]
        %v1313 = vld [vmem:[%s1311 + $0x8] sm:$0xff]
        %v1314 = vld [vmem:[%s1311 + $0x10] sm:$0xff]
        %v1315 = vld [vmem:[%s1311 + $0x18] sm:$0xff]
        %s1316 = scalar_lea.vmem %s2, 160
        %v1317 = vld [vmem:[%s1316] sm:$0xff]
        %v1318 = vld [vmem:[%s1316 + $0x8] sm:$0xff]
        %v1319 = vld [vmem:[%s1316 + $0x10] sm:$0xff]
        %v1320 = vld [vmem:[%s1316 + $0x18] sm:$0xff]
        %1322 = vset.pattern.permute.xlu0 0
        %1323 = vperm.xlu0 %1322, %v1317
        %v1324 = vpop.permute.xlu0 %1323
        %1327 = vset.pattern.permute.xlu0 0
        %1328 = vperm.xlu0 %1327, %v1318
        %v1329 = vpop.permute.xlu0 %1328
        %1332 = vset.pattern.permute.xlu0 0
        %1333 = vperm.xlu0 %1332, %v1319
        %v1334 = vpop.permute.xlu0 %1333
        %1337 = vset.pattern.permute.xlu0 0
        %1338 = vperm.xlu0 %1337, %v1320
        %v1339 = vpop.permute.xlu0 %1338
        %v1342 = vsel %vm267, %v1312, 0
        %v1345 = vsel %vm267, %v1313, 0
        %v1348 = vsel %vm267, %v1314, 0
        %v1351 = vsel %vm267, %v1315, 0
        %1353 = vmatprep.subr.mxu0 0.0
        %1354 = vmatpush1.msra.mxu0 %v1294
        %1355 = vmatprep.subr.mxu0 0.0
        %1356 = vmatpush1.msra.mxu0 %v1295
        %1357 = vmatprep.subr.mxu0 0.0
        %1358 = vmatpush1.msra.mxu0 %v1296
        %1359 = vmatprep.subr.mxu0 0.0
        %1360 = vmatpush1.msra.mxu0 %v1297
        %1361 = vmatprep.subr.mxu0 0.0
        %1362 = vmatpush1.msra.mxu0 %v1281
        %1363 = vmatprep.subr.mxu0 0.0
        %1364 = vmatpush1.msra.mxu0 %v1282
        %1365 = vmatprep.subr.mxu0 0.0
        %1366 = vmatpush1.msra.mxu0 %v1283
        %1367 = vmatprep.subr.mxu0 0.0
        %1368 = vmatpush1.msra.mxu0 %v1284
        %1369 = vmatprep.subr.mxu0 0.0
        %1370 = vmatpush1.msra.mxu0 %v1307
        %1371 = vmatprep.subr.mxu0 0.0
        %1372 = vmatpush1.msra.mxu0 %v1308
        %1373 = vmatprep.subr.mxu0 0.0
        %1374 = vmatpush1.msra.mxu0 %v1309
        %1375 = vmatprep.subr.mxu0 0.0
        %1376 = vmatpush1.msra.mxu0 %v1310
        %1377 = vmatprep.subr.mxu0 0.0
        %1378 = vmatpush1.msra.mxu0 0.0
        %1379 = vmatprep.subr.mxu0 0.0
        %1380 = vmatpush1.msra.mxu0 0.0
        %1381 = vmatprep.subr.mxu0 0.0
        %1382 = vmatpush1.msra.mxu0 0.0
        %1383 = vmatprep.subr.mxu0 0.0
        %1384 = vmatpush1.msra.mxu0 0.0
        %1385 = vmatprep.subr.mxu0 0.0
        %1386 = vmatpush1.msra.mxu0 0.0
        %1387 = vmatprep.subr.mxu0 0.0
        %1388 = vmatpush1.msra.mxu0 0.0
        %1389 = vmatprep.subr.mxu0 0.0
        %1390 = vmatpush1.msra.mxu0 0.0
        %1391 = vmatprep.subr.mxu0 0.0
        %1392 = vmatpush1.msra.mxu0 0.0
        %1393 = vmatprep.subr.mxu0 0.0
        %1394 = vmatpush1.msra.mxu0 0.0
        %1395 = vmatprep.subr.mxu0 0.0
        %1396 = vmatpush1.msra.mxu0 0.0
        %1397 = vmatprep.subr.mxu0 0.0
        %1398 = vmatpush1.msra.mxu0 0.0
        %1399 = vmatprep.subr.mxu0 0.0
        %1400 = vmatpush1.msra.mxu0 0.0
        %1401 = vmatprep.subr.mxu0 0.0
        %1402 = vmatpush1.msra.mxu0 0.0
        %1403 = vmatprep.subr.mxu0 0.0
        %1404 = vmatpush1.msra.mxu0 0.0
        %1405 = vmatprep.subr.mxu0 0.0
        %1406 = vmatpush1.msra.mxu0 0.0
        %1407 = vmatprep.subr.mxu0 0.0
        %1408 = vmatpush1.msra.mxu0 0.0
        %1409 = vmatprep.subr.mxu0 0.0
        %1410 = vmatpush1.msra.mxu0 0.0
        %1411 = vmatprep.subr.mxu0 0.0
        %1412 = vmatpush1.msra.mxu0 0.0
        %1413 = vmatprep.subr.mxu0 0.0
        %1414 = vmatpush1.msra.mxu0 0.0
        %1415 = vmatprep.subr.mxu0 0.0
        %1416 = vmatpush1.msra.mxu0 0.0
        %1417 = vmatprep.mubr.f32.mxu0 0.0
        %1418 = vmatmul.mubr.f32.gmra.mrb[0].mxu0 %v1342
        %v1419 = vpop.f32.mrb[0].mxu0
        %v1420 = vadd.f32 %v1324, %v1419
        %v1421 = vpop.f32.mrb[0].mxu0
        %1422 = vmatprep.mubr.f32.mxu0 0.0
        %1423 = vmatmul.mubr.f32.gmra.mrb[0].mxu0 %v1345
        %v1424 = vpop.f32.mrb[0].mxu0
        %v1425 = vadd.f32 %v1329, %v1424
        %v1426 = vpop.f32.mrb[0].mxu0
        %1427 = vmatprep.mubr.f32.mxu0 0.0
        %1428 = vmatmul.mubr.f32.gmra.mrb[0].mxu0 %v1348
        %v1429 = vpop.f32.mrb[0].mxu0
        %v1430 = vadd.f32 %v1334, %v1429
        %v1431 = vpop.f32.mrb[0].mxu0
        %1432 = vmatprep.mubr.f32.mxu0 0.0
        %1433 = vmatmul.mubr.f32.gmra.mrb[0].mxu0 %v1351
        %v1434 = vpop.f32.mrb[0].mxu0
        %v1435 = vadd.f32 %v1339, %v1434
        %v1436 = vpop.f32.mrb[0].mxu0
        %1437 = vdwg.mxu0
        %v1438 = vmax.f32 %v1420, -30.0
        %v1439 = vmax.f32 %v1425, -30.0
        %v1440 = vmax.f32 %v1430, -30.0
        %v1441 = vmax.f32 %v1435, -30.0
        %v1442 = vsub.f32 0.0, %v1438
        %v1443 = vsub.f32 0.0, %v1439
        %v1444 = vsub.f32 0.0, %v1440
        %v1445 = vsub.f32 0.0, %v1441
        %v1446 = vmul.f32 %v1442, 1.442695
        %v1447 = vpow.pop %v1446
        %v1448 = vmul.f32 %v1443, 1.442695
        %v1449 = vpow.pop %v1448
        %v1450 = vmul.f32 %v1444, 1.442695
        %v1451 = vpow.pop %v1450
        %v1452 = vmul.f32 %v1445, 1.442695
        %v1453 = vpow.pop %v1452
        %v1454 = vsub.f32 1.0, %v1447
        %v1455 = vsub.f32 1.0, %v1449
        %v1456 = vsub.f32 1.0, %v1451
        %v1457 = vsub.f32 1.0, %v1453
        %v1458 = vmul.f32 %v1447, %v1447
        %v1459 = vmul.f32 %v1449, %v1449
        %v1460 = vmul.f32 %v1451, %v1451
        %v1461 = vmul.f32 %v1453, %v1453
        %v1462 = vadd.f32 %v1458, 1.0
        %v1463 = vadd.f32 %v1459, 1.0
        %v1464 = vadd.f32 %v1460, 1.0
        %v1465 = vadd.f32 %v1461, 1.0
        %v1466 = vrcp.pop %v1462
        %v1467 = vmul.f32 %v1454, %v1466
        %v1468 = vrcp.pop %v1463
        %v1469 = vmul.f32 %v1455, %v1468
        %v1470 = vrcp.pop %v1464
        %v1471 = vmul.f32 %v1456, %v1470
        %v1472 = vrcp.pop %v1465
        %v1473 = vmul.f32 %v1457, %v1472
        %v1474 = vadd.f32 %v1467, %v1281
        %v1475 = vadd.f32 %v1469, %v1282
        %v1476 = vadd.f32 %v1471, %v1283
        %v1477 = vadd.f32 %v1473, %v1284
        %1478 = vst [vmem:[%s215] sm:$0xff] %v1474
        %1479 = vst [vmem:[%s215 + $0x8] sm:$0xff] %v1475
        %1480 = vst [vmem:[%s215 + $0x10] sm:$0xff] %v1476
        %1481 = vst [vmem:[%s215 + $0x18] sm:$0xff] %v1477
        %s1482 = sand.u32 %s137, 1
        %s1483 = scalar_lea.sflag [#allocation3], %s1482
        %s1484 = sand.u32 %s137, 1
        %s1485 = smul.addr %s1484, 32
        %s1486 = scalar_lea.vmem [#allocation2], %s1485
        // Predicated region
        $region41: #{tpu_custom_call.1} parent=39 // pred_check
          %p1487 = pneg %p147
        $region42: #{tpu_custom_call.1} parent=39 // pred_check_branch
          %1489 = sbr.rel (%p1487) target = $region44
        $region43: #{tpu_custom_call.1} parent=39 // pred_region
          %s1491 = ssub.s32 512, 512
          %1492 = vsyncadd %s1483, %s1491
          %s1493 = smul.addr %s19, 4
          %s1494 = smul.addr %s1493, 128
          %s1495 = scalar_lea.hbm %s5, %s1494
          %s1496 = sshll.u32 %s1486, 4
          %s1497 = int_to_ptr.vmem [resolvable:$true] %s1496
          %1502 = dma.vmem_to_hbm [thread:$0]  %s1497, 512, %s1495, %s1483, 128, 128, 8
        $region44: #{tpu_custom_call.1} parent=39 // pred_fallthru
          _
      $region40: #{tpu_custom_call.1} parent=5 // pred_fallthru
        _
      %p1503 = scmp.le.s32.totalorder 2, %s14
      // Predicated region
      $region45: #{tpu_custom_call.1} parent=5 // pred_check
        %p1504 = pneg %p1503
      $region46: #{tpu_custom_call.1} parent=5 // pred_check_branch
        %1506 = sbr.rel (%p1504) target = $region48
      $region47: #{tpu_custom_call.1} parent=5 // pred_region
        %s1507 = ssub.s32 %s14, 2
        // Predicated region
        $region49: #{tpu_custom_call.1} parent=47 // pred_check
          %p1508 = pneg %p153
        $region50: #{tpu_custom_call.1} parent=47 // pred_check_branch
          %1510 = sbr.rel (%p1508) target = $region52
        $region51: #{tpu_custom_call.1} parent=47 // pred_region
          %s1511 = sand.u32 %s138, 1
          %s1512 = scalar_lea.sflag [#allocation3], %s1511
          %s1513 = sand.u32 %s138, 1
          %s1514 = smul.addr %s1513, 32
          %s1515 = scalar_lea.vmem [#allocation2], %s1514
          %1516 = dma.done %s1512, 512
        $region52: #{tpu_custom_call.1} parent=47 // pred_fallthru
          _
      $region48: #{tpu_custom_call.1} parent=5 // pred_fallthru
        _
    $region6: #{tpu_custom_call.1} parent=1 // loop_footer
      %s18 = sadd.s32 1, %s14
    $region7: #{tpu_custom_call.1} parent=1 // loop_footer_branch
      %13 = sbr.rel target = $region3
    $region8: #{tpu_custom_call.1} parent=1 // loop_exit
      _
    %1517 = vsyncpa [#allocation3], 1
    %s1518 = scalar_lea.sflag [#allocation3], 1
    %1519 = vsyncpa %s1518, 1

</llo_original>
